<compile_context>
chip_gen: v7x
topology: tpu7x:2x2x1
jax: 0.10.0
libtpu: 0.0.40
codegen_flags: <defaults>
</compile_context>

<pallas_src>
import math

import numpy as np
import jax
import jax.numpy as jnp
from jax import lax
from jax.experimental import pallas as pl
from jax.experimental.pallas import tpu as pltpu

# ---------------------------------------------------------------------------
# Model dimensions (small, consistent with the module's __init__ signature)
# ---------------------------------------------------------------------------
BATCH = 2
SEQ = 8
EMBED_DIM = 32
HEAD_NUM = 4
MLP_DIM = 64
HEAD_DIM = EMBED_DIM // HEAD_NUM
LN_EPS = 1e-5

# ---- packed weight stack: one (200, 128) array, row ranges all 8-aligned ----
ROW_WQKV = 0                      # (32,  96)  qkv Linear weight (transposed)
ROW_WO = 32                       # (32,  32)  output-projection weight (T)
ROW_W1 = 64                       # (32,  64)  MLP fc1 weight (T)
ROW_W2 = 96                       # (64,  32)  MLP fc2 weight (T)
ROW_SEL = 160                     # (32,   4)  head selector, pre-scaled 1/sqrt(dh)
ROW_SELT = 192                    # ( 4,  32)  head selector transpose (0/1)
WSTACK_ROWS = 200                 # multiple of 8
WSTACK_LANES = 128

# ---- packed small vectors: one (8, 128) array, one vector per sublane row ---
ROW_LN1_G = 0
ROW_LN1_B = 1
ROW_FC1_B = 2                     # MLP_DIM wide
ROW_FC2_B = 3
ROW_LN2_G = 4
ROW_LN2_B = 5
VEC_ROWS = 8
VEC_LANES = 128


# ---------------------------------------------------------------------------
# Pallas kernel: full transformer encoder block, all batches fused
# ---------------------------------------------------------------------------
def encoder_block_kernel(
    x_ref,       # (B*T, D)
    wstack_ref,  # (200, 128)  packed weights + head selectors
    vec_ref,     # (8, 128)    packed ln1_g|ln1_b|fc1_b|fc2_b|ln2_g|ln2_b
    o_ref,       # (B*T, D)
):
    B, T, H, DH, D, M = BATCH, SEQ, HEAD_NUM, HEAD_DIM, EMBED_DIM, MLP_DIM
    x = x_ref[...]                                                   # (B*T, D) f32

    # ---- unpack small vectors: sublane-row picks, lanes start at 0 ---------
    ln1_g = vec_ref[ROW_LN1_G:ROW_LN1_G + 1, 0:D]
    ln1_b = vec_ref[ROW_LN1_B:ROW_LN1_B + 1, 0:D]
    fc1_b = vec_ref[ROW_FC1_B:ROW_FC1_B + 1, 0:M]
    fc2_b = vec_ref[ROW_FC2_B:ROW_FC2_B + 1, 0:D]
    ln2_g = vec_ref[ROW_LN2_G:ROW_LN2_G + 1, 0:D]
    ln2_b = vec_ref[ROW_LN2_B:ROW_LN2_B + 1, 0:D]

    # ---- unpack weights: 8-aligned row ranges, lane-0-based slices ---------
    wqkv = wstack_ref[ROW_WQKV:ROW_WQKV + D, 0:3 * D]                # (D, 3D)
    wo = wstack_ref[ROW_WO:ROW_WO + D, 0:D]                          # (D, D)
    w1 = wstack_ref[ROW_W1:ROW_W1 + D, 0:M]                          # (D, M)
    w2 = wstack_ref[ROW_W2:ROW_W2 + M, 0:D]                          # (M, D)
    sel = wstack_ref[ROW_SEL:ROW_SEL + D, 0:H]                       # (D, H) pre-scaled
    sel_t = wstack_ref[ROW_SELT:ROW_SELT + H, 0:D]                   # (H, D) 0/1

    # ---- fused qkv projection for every (batch, token) row -----------------
    qkv = jnp.dot(x, wqkv, preferred_element_type=jnp.float32)       # (B*T, 3D)
    q = qkv[:, 0:D].reshape(B, T, D)
    k = qkv[:, D:2 * D].reshape(B, T, D)
    v = qkv[:, 2 * D:3 * D].reshape(B, T, D)

    # ---- all heads / all batches attention, no per-head loop ---------------
    # scores[(b,i,j), h] = (1/sqrt(dh)) * sum_{d in head h} q[b,i,d] * k[b,j,d]
    # (the 1/sqrt(dh) is folded into `sel`)
    prod = q[:, :, None, :] * k[:, None, :, :]                       # (B, Ti, Tj, D)
    scores = jnp.dot(prod.reshape(B * T * T, D), sel,
                     preferred_element_type=jnp.float32)             # (B*Ti*Tj, H)

    # softmax over the key axis (second-minor / sublane reduction)
    s3 = scores.reshape(B * T, T, H)                                 # (B*Ti, Tj, H)
    s3 = s3 - jnp.max(s3, axis=1, keepdims=True)
    p = jnp.exp(s3)
    p = p / jnp.sum(p, axis=1, keepdims=True)    # exact divide: keeps 2e-4 tolerance

    # broadcast each head's probability across its dh lanes, weight V, reduce over keys
    p_lane = jnp.dot(p.reshape(B * T * T, H), sel_t,
                     preferred_element_type=jnp.float32)             # (B*Ti*Tj, D)
    p4 = p_lane.reshape(B, T, T, D)
    ctx = jnp.sum(p4 * v[:, None, :, :], axis=2)                     # (B, Ti, D)

    # single output projection for all rows
    attn = jnp.dot(ctx.reshape(B * T, D), wo,
                   preferred_element_type=jnp.float32)               # (B*T, D)

    # ---- residual + LayerNorm1 ----------------------------------------------
    x1 = x + attn
    mu1 = jnp.mean(x1, axis=-1, keepdims=True)
    var1 = jnp.mean((x1 - mu1) ** 2, axis=-1, keepdims=True)
    x1n = (x1 - mu1) * lax.rsqrt(var1 + LN_EPS) * ln1_g + ln1_b

    # ---- MLP -----------------------------------------------------------------
    h1 = jnp.dot(x1n, w1, preferred_element_type=jnp.float32) + fc1_b
    h1 = 0.5 * h1 * (1.0 + lax.erf(h1 * (1.0 / math.sqrt(2.0))))     # exact GELU
    h2 = jnp.dot(h1, w2, preferred_element_type=jnp.float32) + fc2_b

    # ---- residual + LayerNorm2 -----------------------------------------------
    x2 = x1n + h2
    mu2 = jnp.mean(x2, axis=-1, keepdims=True)
    var2 = jnp.mean((x2 - mu2) ** 2, axis=-1, keepdims=True)
    out = (x2 - mu2) * lax.rsqrt(var2 + LN_EPS) * ln2_g + ln2_b
    o_ref[...] = out.astype(o_ref.dtype)


# ---------------------------------------------------------------------------
# Wrapper: single pallas_call, no grid, everything resident in VMEM (3 DMAs in)
# ---------------------------------------------------------------------------
@jax.jit
def encoder_bottleneck(x, params):
    B, T, D = x.shape
    x2d = x.reshape(B * T, D)          # free metadata-only reshape under jit

    vmem = pl.BlockSpec(memory_space=pltpu.MemorySpace.VMEM)
    out2d = pl.pallas_call(
        encoder_block_kernel,
        out_shape=jax.ShapeDtypeStruct((B * T, D), x.dtype),
        in_specs=[vmem, vmem, vmem],
        out_specs=pl.BlockSpec(memory_space=pltpu.MemorySpace.VMEM),
    )(x2d, params["wstack"], params["vec_pack"])
    return out2d.reshape(B, T, D)


# ---------------------------------------------------------------------------
# Pure-JAX reference (same math) for the correctness check
# ---------------------------------------------------------------------------
def reference(x, params):
    qkv = x @ params["wqkv_t"]
    q, k, v = jnp.split(qkv, 3, axis=-1)

    def split_heads(t):  # (B, T, D) -> (B, H, T, dh)
        B, T, _ = t.shape
        return t.reshape(B, T, HEAD_NUM, HEAD_DIM).transpose(0, 2, 1, 3)

    qh, kh, vh = split_heads(q), split_heads(k), split_heads(v)
    e = jnp.einsum("bhtd,bhsd->bhts", qh, kh) / math.sqrt(HEAD_DIM)
    p = jax.nn.softmax(e, axis=-1)
    ctx = jnp.einsum("bhts,bhsd->bhtd", p, vh)
    ctx = ctx.transpose(0, 2, 1, 3).reshape(x.shape)
    attn = ctx @ params["wo_t"]

    def ln(t, g, b):
        mu = jnp.mean(t, axis=-1, keepdims=True)
        var = jnp.mean((t - mu) ** 2, axis=-1, keepdims=True)
        return (t - mu) / jnp.sqrt(var + LN_EPS) * g + b

    x1 = ln(x + attn, params["ln1_g"][0], params["ln1_b"][0])
    h = x1 @ params["w1_t"] + params["b1"][0]
    h = 0.5 * h * (1.0 + lax.erf(h / math.sqrt(2.0)))
    h = h @ params["w2_t"] + params["b2"][0]
    return ln(x1 + h, params["ln2_g"][0], params["ln2_b"][0])


# ---------------------------------------------------------------------------
def init_params(key):
    ks = jax.random.split(key, 6)
    s = 0.05
    D, M, H, DH = EMBED_DIM, MLP_DIM, HEAD_NUM, HEAD_DIM
    params = {
        # Stored pre-transposed so the kernel computes y = x @ W_t directly
        # (PyTorch Linear weight layouts: (3D, D), (D, D), (M, D), (D, M)).
        "wqkv_t": (jax.random.normal(ks[0], (3 * D, D)) * s).T.astype(jnp.float32),
        "wo_t":   (jax.random.normal(ks[1], (D, D)) * s).T.astype(jnp.float32),
        "w1_t":   (jax.random.normal(ks[2], (M, D)) * s).T.astype(jnp.float32),
        "b1":     (jax.random.normal(ks[3], (1, M)) * s).astype(jnp.float32),
        "w2_t":   (jax.random.normal(ks[4], (D, M)) * s).T.astype(jnp.float32),
        "b2":     (jax.random.normal(ks[5], (1, D)) * s).astype(jnp.float32),
        "ln1_g":  jnp.ones((1, D), jnp.float32),
        "ln1_b":  jnp.zeros((1, D), jnp.float32),
        "ln2_g":  jnp.ones((1, D), jnp.float32),
        "ln2_b":  jnp.zeros((1, D), jnp.float32),
    }

    # Head-selector constants, baked at init time; 1/sqrt(dh) folded into sel.
    sel = np.zeros((D, H), np.float32)
    sel_t = np.zeros((H, D), np.float32)
    for hh in range(H):
        sel[hh * DH:(hh + 1) * DH, hh] = 1.0 / math.sqrt(DH)
        sel_t[hh, hh * DH:(hh + 1) * DH] = 1.0

    # Sublane-stacked, 128-lane-padded weight pack: ONE DMA for all weights.
    wstack = np.zeros((WSTACK_ROWS, WSTACK_LANES), np.float32)
    wstack[ROW_WQKV:ROW_WQKV + D, 0:3 * D] = np.asarray(params["wqkv_t"])
    wstack[ROW_WO:ROW_WO + D, 0:D] = np.asarray(params["wo_t"])
    wstack[ROW_W1:ROW_W1 + D, 0:M] = np.asarray(params["w1_t"])
    wstack[ROW_W2:ROW_W2 + M, 0:D] = np.asarray(params["w2_t"])
    wstack[ROW_SEL:ROW_SEL + D, 0:H] = sel
    wstack[ROW_SELT:ROW_SELT + H, 0:D] = sel_t
    params["wstack"] = jnp.asarray(wstack)

    # Row-per-vector (8, 128) pack of the six small per-channel vectors.
    vec = np.zeros((VEC_ROWS, VEC_LANES), np.float32)
    vec[ROW_LN1_G, 0:D] = np.asarray(params["ln1_g"][0])
    vec[ROW_LN1_B, 0:D] = np.asarray(params["ln1_b"][0])
    vec[ROW_FC1_B, 0:M] = np.asarray(params["b1"][0])
    vec[ROW_FC2_B, 0:D] = np.asarray(params["b2"][0])
    vec[ROW_LN2_G, 0:D] = np.asarray(params["ln2_g"][0])
    vec[ROW_LN2_B, 0:D] = np.asarray(params["ln2_b"][0])
    params["vec_pack"] = jnp.asarray(vec)
    return params


if __name__ == "__main__":
    key = jax.random.PRNGKey(0)
    kx, kp = jax.random.split(key)
    x = jax.random.normal(kx, (BATCH, SEQ, EMBED_DIM), jnp.float32)
    params = init_params(kp)

    out = jax.block_until_ready(encoder_bottleneck(x, params))
    ref = reference(x, params)

    assert out.shape == (BATCH, SEQ, EMBED_DIM)
    max_err = float(jnp.max(jnp.abs(out - ref)))
    assert jnp.allclose(out, ref, atol=2e-4, rtol=2e-4), max_err

    print("KERNEL_OK")
</pallas_src>

<mosaic_0001>
module attributes {stable_mosaic.version = 11 : i64} {
  func.func @encoder_block_kernel(%arg0: memref<16x32xf32, #tpu.memory_space<vmem>>, %arg1: memref<200x128xf32, #tpu.memory_space<vmem>>, %arg2: memref<8x128xf32, #tpu.memory_space<vmem>>, %arg3: memref<16x32xf32, #tpu.memory_space<vmem>>) attributes {dimension_semantics = [], scalar_prefetch = 0 : i64, scratch_operands = 0 : i64, tpu.core_type = #tpu.core_type<tc>} {
    %c0 = arith.constant 0 : index
    %c0_0 = arith.constant 0 : index
    %0 = vector.load %arg0[%c0, %c0_0] : memref<16x32xf32, #tpu.memory_space<vmem>>, vector<16x32xf32>
    %c0_1 = arith.constant 0 : index
    %c0_2 = arith.constant 0 : index
    %1 = vector.load %arg2[%c0_1, %c0_2] : memref<8x128xf32, #tpu.memory_space<vmem>>, vector<1x32xf32>
    %c1 = arith.constant 1 : index
    %c0_3 = arith.constant 0 : index
    %2 = vector.load %arg2[%c1, %c0_3] : memref<8x128xf32, #tpu.memory_space<vmem>>, vector<1x32xf32>
    %c2 = arith.constant 2 : index
    %c0_4 = arith.constant 0 : index
    %3 = vector.load %arg2[%c2, %c0_4] : memref<8x128xf32, #tpu.memory_space<vmem>>, vector<1x64xf32>
    %c3 = arith.constant 3 : index
    %c0_5 = arith.constant 0 : index
    %4 = vector.load %arg2[%c3, %c0_5] : memref<8x128xf32, #tpu.memory_space<vmem>>, vector<1x32xf32>
    %c4 = arith.constant 4 : index
    %c0_6 = arith.constant 0 : index
    %5 = vector.load %arg2[%c4, %c0_6] : memref<8x128xf32, #tpu.memory_space<vmem>>, vector<1x32xf32>
    %c5 = arith.constant 5 : index
    %c0_7 = arith.constant 0 : index
    %6 = vector.load %arg2[%c5, %c0_7] : memref<8x128xf32, #tpu.memory_space<vmem>>, vector<1x32xf32>
    %c0_8 = arith.constant 0 : index
    %c0_9 = arith.constant 0 : index
    %7 = vector.load %arg1[%c0_8, %c0_9] : memref<200x128xf32, #tpu.memory_space<vmem>>, vector<32x96xf32>
    %c32 = arith.constant 32 : index
    %c0_10 = arith.constant 0 : index
    %8 = vector.load %arg1[%c32, %c0_10] : memref<200x128xf32, #tpu.memory_space<vmem>>, vector<32x32xf32>
    %c64 = arith.constant 64 : index
    %c0_11 = arith.constant 0 : index
    %9 = vector.load %arg1[%c64, %c0_11] : memref<200x128xf32, #tpu.memory_space<vmem>>, vector<32x64xf32>
    %c96 = arith.constant 96 : index
    %c0_12 = arith.constant 0 : index
    %10 = vector.load %arg1[%c96, %c0_12] : memref<200x128xf32, #tpu.memory_space<vmem>>, vector<64x32xf32>
    %c160 = arith.constant 160 : index
    %c0_13 = arith.constant 0 : index
    %11 = vector.load %arg1[%c160, %c0_13] : memref<200x128xf32, #tpu.memory_space<vmem>>, vector<32x4xf32>
    %c192 = arith.constant 192 : index
    %c0_14 = arith.constant 0 : index
    %12 = vector.load %arg1[%c192, %c0_14] : memref<200x128xf32, #tpu.memory_space<vmem>>, vector<4x32xf32>
    %cst = arith.constant dense<0.000000e+00> : vector<16x96xf32>
    %13 = tpu.matmul %0, %7, %cst {dimension_numbers = #tpu.dot_dimension_numbers<[1], [0], [0], [1], [0, 0, 1, 1], [], []>} : vector<16x32xf32>, vector<32x96xf32>, vector<16x96xf32> -> vector<16x96xf32>
    %14 = vector.extract_strided_slice %13 {offsets = [0, 0], sizes = [16, 32], strides = [1, 1]} : vector<16x96xf32> to vector<16x32xf32>
    %15 = vector.shape_cast %14 : vector<16x32xf32> to vector<2x8x32xf32>
    %16 = vector.extract_strided_slice %13 {offsets = [0, 32], sizes = [16, 32], strides = [1, 1]} : vector<16x96xf32> to vector<16x32xf32>
    %17 = vector.shape_cast %16 : vector<16x32xf32> to vector<2x8x32xf32>
    %18 = vector.extract_strided_slice %13 {offsets = [0, 64], sizes = [16, 32], strides = [1, 1]} : vector<16x96xf32> to vector<16x32xf32>
    %19 = vector.shape_cast %18 : vector<16x32xf32> to vector<2x8x32xf32>
    %20 = vector.shape_cast %15 : vector<2x8x32xf32> to vector<2x8x1x32xf32>
    %21 = vector.shape_cast %17 : vector<2x8x32xf32> to vector<2x1x8x32xf32>
    %22 = vector.broadcast %20 : vector<2x8x1x32xf32> to vector<2x8x8x32xf32>
    %23 = vector.broadcast %21 : vector<2x1x8x32xf32> to vector<2x8x8x32xf32>
    %24 = arith.mulf %22, %23 : vector<2x8x8x32xf32>
    %25 = vector.shape_cast %24 : vector<2x8x8x32xf32> to vector<128x32xf32>
    %cst_15 = arith.constant dense<0.000000e+00> : vector<128x4xf32>
    %26 = tpu.matmul %25, %11, %cst_15 {dimension_numbers = #tpu.dot_dimension_numbers<[1], [0], [0], [1], [0, 0, 1, 1], [], []>} : vector<128x32xf32>, vector<32x4xf32>, vector<128x4xf32> -> vector<128x4xf32>
    %27 = vector.shape_cast %26 : vector<128x4xf32> to vector<16x8x4xf32>
    %cst_16 = arith.constant dense<0xFF800000> : vector<16x4xf32>
    %28 = vector.multi_reduction <maximumf>, %27, %cst_16 [1] : vector<16x8x4xf32> to vector<16x4xf32>
    %29 = vector.shape_cast %28 : vector<16x4xf32> to vector<16x1x4xf32>
    %30 = vector.broadcast %29 : vector<16x1x4xf32> to vector<16x8x4xf32>
    %31 = arith.subf %27, %30 : vector<16x8x4xf32>
    %32 = math.exp %31 : vector<16x8x4xf32>
    %cst_17 = arith.constant dense<0.000000e+00> : vector<16x4xf32>
    %33 = vector.multi_reduction <add>, %32, %cst_17 [1] : vector<16x8x4xf32> to vector<16x4xf32>
    %34 = vector.shape_cast %33 : vector<16x4xf32> to vector<16x1x4xf32>
    %35 = vector.broadcast %34 : vector<16x1x4xf32> to vector<16x8x4xf32>
    %36 = arith.divf %32, %35 : vector<16x8x4xf32>
    %37 = vector.shape_cast %36 : vector<16x8x4xf32> to vector<128x4xf32>
    %cst_18 = arith.constant dense<0.000000e+00> : vector<128x32xf32>
    %38 = tpu.matmul %37, %12, %cst_18 {dimension_numbers = #tpu.dot_dimension_numbers<[1], [0], [0], [1], [0, 0, 1, 1], [], []>} : vector<128x4xf32>, vector<4x32xf32>, vector<128x32xf32> -> vector<128x32xf32>
    %39 = vector.shape_cast %38 : vector<128x32xf32> to vector<2x8x8x32xf32>
    %40 = vector.shape_cast %19 : vector<2x8x32xf32> to vector<2x1x8x32xf32>
    %41 = vector.broadcast %40 : vector<2x1x8x32xf32> to vector<2x8x8x32xf32>
    %42 = arith.mulf %39, %41 : vector<2x8x8x32xf32>
    %cst_19 = arith.constant dense<0.000000e+00> : vector<2x8x32xf32>
    %43 = vector.multi_reduction <add>, %42, %cst_19 [2] : vector<2x8x8x32xf32> to vector<2x8x32xf32>
    %44 = vector.shape_cast %43 : vector<2x8x32xf32> to vector<16x32xf32>
    %cst_20 = arith.constant dense<0.000000e+00> : vector<16x32xf32>
    %45 = tpu.matmul %44, %8, %cst_20 {dimension_numbers = #tpu.dot_dimension_numbers<[1], [0], [0], [1], [0, 0, 1, 1], [], []>} : vector<16x32xf32>, vector<32x32xf32>, vector<16x32xf32> -> vector<16x32xf32>
    %46 = arith.addf %0, %45 : vector<16x32xf32>
    %cst_21 = arith.constant dense<0.000000e+00> : vector<16xf32>
    %47 = vector.multi_reduction <add>, %46, %cst_21 [1] : vector<16x32xf32> to vector<16xf32>
    %48 = vector.shape_cast %47 : vector<16xf32> to vector<16x1xf32>
    %cst_22 = arith.constant 3.200000e+01 : f32
    %49 = vector.broadcast %cst_22 : f32 to vector<16x1xf32>
    %50 = arith.divf %48, %49 : vector<16x1xf32>
    %51 = vector.broadcast %50 : vector<16x1xf32> to vector<16x32xf32>
    %52 = arith.subf %46, %51 : vector<16x32xf32>
    %53 = arith.mulf %52, %52 : vector<16x32xf32>
    %cst_23 = arith.constant dense<0.000000e+00> : vector<16xf32>
    %54 = vector.multi_reduction <add>, %53, %cst_23 [1] : vector<16x32xf32> to vector<16xf32>
    %55 = vector.shape_cast %54 : vector<16xf32> to vector<16x1xf32>
    %cst_24 = arith.constant 3.200000e+01 : f32
    %56 = vector.broadcast %cst_24 : f32 to vector<16x1xf32>
    %57 = arith.divf %55, %56 : vector<16x1xf32>
    %58 = vector.broadcast %50 : vector<16x1xf32> to vector<16x32xf32>
    %59 = arith.subf %46, %58 : vector<16x32xf32>
    %cst_25 = arith.constant 9.99999974E-6 : f32
    %60 = vector.broadcast %cst_25 : f32 to vector<16x1xf32>
    %61 = arith.addf %57, %60 : vector<16x1xf32>
    %62 = math.rsqrt %61 : vector<16x1xf32>
    %63 = vector.broadcast %62 : vector<16x1xf32> to vector<16x32xf32>
    %64 = arith.mulf %59, %63 : vector<16x32xf32>
    %65 = vector.broadcast %1 : vector<1x32xf32> to vector<16x32xf32>
    %66 = arith.mulf %64, %65 : vector<16x32xf32>
    %67 = vector.broadcast %2 : vector<1x32xf32> to vector<16x32xf32>
    %68 = arith.addf %66, %67 : vector<16x32xf32>
    %cst_26 = arith.constant dense<0.000000e+00> : vector<16x64xf32>
    %69 = tpu.matmul %68, %9, %cst_26 {dimension_numbers = #tpu.dot_dimension_numbers<[1], [0], [0], [1], [0, 0, 1, 1], [], []>} : vector<16x32xf32>, vector<32x64xf32>, vector<16x64xf32> -> vector<16x64xf32>
    %70 = vector.broadcast %3 : vector<1x64xf32> to vector<16x64xf32>
    %71 = arith.addf %69, %70 : vector<16x64xf32>
    %cst_27 = arith.constant 5.000000e-01 : f32
    %72 = vector.broadcast %cst_27 : f32 to vector<16x64xf32>
    %73 = arith.mulf %72, %71 : vector<16x64xf32>
    %cst_28 = arith.constant 0.707106769 : f32
    %74 = vector.broadcast %cst_28 : f32 to vector<16x64xf32>
    %75 = arith.mulf %71, %74 : vector<16x64xf32>
    %76 = math.erf %75 : vector<16x64xf32>
    %cst_29 = arith.constant 1.000000e+00 : f32
    %77 = vector.broadcast %cst_29 : f32 to vector<16x64xf32>
    %78 = arith.addf %77, %76 : vector<16x64xf32>
    %79 = arith.mulf %73, %78 : vector<16x64xf32>
    %cst_30 = arith.constant dense<0.000000e+00> : vector<16x32xf32>
    %80 = tpu.matmul %79, %10, %cst_30 {dimension_numbers = #tpu.dot_dimension_numbers<[1], [0], [0], [1], [0, 0, 1, 1], [], []>} : vector<16x64xf32>, vector<64x32xf32>, vector<16x32xf32> -> vector<16x32xf32>
    %81 = vector.broadcast %4 : vector<1x32xf32> to vector<16x32xf32>
    %82 = arith.addf %80, %81 : vector<16x32xf32>
    %83 = arith.addf %68, %82 : vector<16x32xf32>
    %cst_31 = arith.constant dense<0.000000e+00> : vector<16xf32>
    %84 = vector.multi_reduction <add>, %83, %cst_31 [1] : vector<16x32xf32> to vector<16xf32>
    %85 = vector.shape_cast %84 : vector<16xf32> to vector<16x1xf32>
    %cst_32 = arith.constant 3.200000e+01 : f32
    %86 = vector.broadcast %cst_32 : f32 to vector<16x1xf32>
    %87 = arith.divf %85, %86 : vector<16x1xf32>
    %88 = vector.broadcast %87 : vector<16x1xf32> to vector<16x32xf32>
    %89 = arith.subf %83, %88 : vector<16x32xf32>
    %90 = arith.mulf %89, %89 : vector<16x32xf32>
    %cst_33 = arith.constant dense<0.000000e+00> : vector<16xf32>
    %91 = vector.multi_reduction <add>, %90, %cst_33 [1] : vector<16x32xf32> to vector<16xf32>
    %92 = vector.shape_cast %91 : vector<16xf32> to vector<16x1xf32>
    %cst_34 = arith.constant 3.200000e+01 : f32
    %93 = vector.broadcast %cst_34 : f32 to vector<16x1xf32>
    %94 = arith.divf %92, %93 : vector<16x1xf32>
    %95 = vector.broadcast %87 : vector<16x1xf32> to vector<16x32xf32>
    %96 = arith.subf %83, %95 : vector<16x32xf32>
    %cst_35 = arith.constant 9.99999974E-6 : f32
    %97 = vector.broadcast %cst_35 : f32 to vector<16x1xf32>
    %98 = arith.addf %94, %97 : vector<16x1xf32>
    %99 = math.rsqrt %98 : vector<16x1xf32>
    %100 = vector.broadcast %99 : vector<16x1xf32> to vector<16x32xf32>
    %101 = arith.mulf %96, %100 : vector<16x32xf32>
    %102 = vector.broadcast %5 : vector<1x32xf32> to vector<16x32xf32>
    %103 = arith.mulf %101, %102 : vector<16x32xf32>
    %104 = vector.broadcast %6 : vector<1x32xf32> to vector<16x32xf32>
    %105 = arith.addf %103, %104 : vector<16x32xf32>
    %c0_36 = arith.constant 0 : index
    %c0_37 = arith.constant 0 : index
    %106 = vector.load %arg3[%c0_36, %c0_37] : memref<16x32xf32, #tpu.memory_space<vmem>>, vector<16x32xf32>
    tpu.vector_store %arg3[%c0_36, %c0_37], %105 {strides = array<i32>} : memref<16x32xf32, #tpu.memory_space<vmem>>, vector<16x32xf32>,
    return
  }
}

</mosaic_0001>

<llo_original>
// kernel: encoder_bottleneck.1
$region0: #{encoder_bottleneck.1}
  #allocation0 [shape = 'u32[]', space=smem, size = 0x4, offset = 0x4, fixed_abs, tag = 'smem constant byte address 0x4 - core index']
  #allocation1 [shape = 'u32[144,128]{1,0:T(1,128)}', space=vmem, size = 0x12000, scoped, tag = 'internal scratch']
  %s0 = inlined_call_operand.hbm [shape: f32[16,32], index: 0, kind: input, shape index: {}]
  %s1 = inlined_call_operand.hbm [shape: f32[200,128], index: 1, kind: input, shape index: {}]
  %s2 = inlined_call_operand.hbm [shape: f32[8,128], index: 2, kind: input, shape index: {}]
  %s3 = inlined_call_operand.hbm [shape: f32[16,32], index: 3, kind: output, shape index: {}]
  %s4 = sld [smem:[#allocation0]]
  $region34: #{encoder_bottleneck.1} parent=0
    _
  %s6 = ssub.s32 1, %s4
  %s7 = scalar_select 0, %s6, %s4
  $region1: #{encoder_bottleneck.1} parent=0
    #allocation2 [shape = 'u8[8192]{0}', space=vmem, size = 0x2000, scoped, tag = 'input window, operand 0, single buffered']
    #allocation3 [shape = 's32[1]{0}', space=sflag, size = 0x4, scoped, tag = 'scoped memory for encoder_bottleneck.1']
    #allocation4 [shape = 's32[1]{0}', space=sflag, size = 0x4, scoped, tag = 'scoped memory for encoder_bottleneck.1']
    #allocation5 [shape = 'u8[102400]{0}', space=vmem, size = 0x19000, scoped, tag = 'input window, operand 1, single buffered']
    #allocation6 [shape = 's32[1]{0}', space=sflag, size = 0x4, scoped, tag = 'scoped memory for encoder_bottleneck.1']
    #allocation7 [shape = 'u8[4096]{0}', space=vmem, size = 0x1000, scoped, tag = 'input window, operand 2, single buffered']
    #allocation8 [shape = 'u8[8192]{0}', space=vmem, size = 0x2000, scoped, tag = 'output window, operand 0, single buffered']
    %8 = vsyncpa [#allocation3], 0
    %9 = vsyncpa [#allocation6], 0
    %10 = vsyncpa [#allocation4], 0
    // Predicated region
    $region2: #{encoder_bottleneck.1} parent=1 // pred_check
      _
    $region3: #{encoder_bottleneck.1} parent=1 // pred_check_branch
      %12 = sbr.rel (0) target = $region5
    $region4: #{encoder_bottleneck.1} parent=1 // pred_region
      %s14 = ssub.s32 256, 256
      %15 = vsyncadd [#allocation3], %s14
      %s16 = sshll.u32 [#allocation2], 4
      %s17 = int_to_ptr.vmem [resolvable:$true] %s16
      %22 = dma.hbm_to_vmem [thread:$0]  %s0, 256, %s17, [#allocation3], 128, 128, 8
    $region5: #{encoder_bottleneck.1} parent=1 // pred_fallthru
      _
    // Predicated region
    $region6: #{encoder_bottleneck.1} parent=1 // pred_check
      _
    $region7: #{encoder_bottleneck.1} parent=1 // pred_check_branch
      %24 = sbr.rel (0) target = $region9
    $region8: #{encoder_bottleneck.1} parent=1 // pred_region
      %s26 = ssub.s32 3200, 3200
      %27 = vsyncadd [#allocation6], %s26
      %s28 = sshll.u32 [#allocation5], 4
      %s29 = int_to_ptr.vmem [resolvable:$true] %s28
      %34 = dma.hbm_to_vmem [thread:$0]  %s1, 3200, %s29, [#allocation6], 128, 128, 8
    $region9: #{encoder_bottleneck.1} parent=1 // pred_fallthru
      _
    // Predicated region
    $region10: #{encoder_bottleneck.1} parent=1 // pred_check
      _
    $region11: #{encoder_bottleneck.1} parent=1 // pred_check_branch
      %36 = sbr.rel (0) target = $region13
    $region12: #{encoder_bottleneck.1} parent=1 // pred_region
      %s38 = ssub.s32 128, 128
      %39 = vsyncadd [#allocation6], %s38
      %s41 = sshll.u32 [#allocation7], 4
      %s42 = int_to_ptr.vmem [resolvable:$true] %s41
      %44 = dma.hbm_to_vmem [thread:$0]  %s2, 128, %s42, [#allocation6]
    $region13: #{encoder_bottleneck.1} parent=1 // pred_fallthru
      _
    // Predicated region
    $region14: #{encoder_bottleneck.1} parent=1 // pred_check
      _
    $region15: #{encoder_bottleneck.1} parent=1 // pred_check_branch
      %46 = sbr.rel (0) target = $region17
    $region16: #{encoder_bottleneck.1} parent=1 // pred_region
      %47 = dma.done [#allocation3], 256
    $region17: #{encoder_bottleneck.1} parent=1 // pred_fallthru
      _
    // Predicated region
    $region18: #{encoder_bottleneck.1} parent=1 // pred_check
      _
    $region19: #{encoder_bottleneck.1} parent=1 // pred_check_branch
      %49 = sbr.rel (0) target = $region21
    $region20: #{encoder_bottleneck.1} parent=1 // pred_region
      %50 = dma.done [#allocation6], 3200
    $region21: #{encoder_bottleneck.1} parent=1 // pred_fallthru
      _
    // Predicated region
    $region22: #{encoder_bottleneck.1} parent=1 // pred_check
      _
    $region23: #{encoder_bottleneck.1} parent=1 // pred_check_branch
      %52 = sbr.rel (0) target = $region25
    $region24: #{encoder_bottleneck.1} parent=1 // pred_region
      %53 = dma.done [#allocation6], 128
    $region25: #{encoder_bottleneck.1} parent=1 // pred_fallthru
      _
    %v54 = vld [vmem:[#allocation2] sm:$0xff]
    %v55 = vld [vmem:[#allocation2 + $0x8] sm:$0xff]
    %v56 = vld [vmem:[#allocation7] sm:$0x1]
    %v57 = vld [vmem:[#allocation7 + $0x1] sm:$0x1]
    %v58 = vld [vmem:[#allocation7 + $0x2] sm:$0x1]
    %v59 = vld [vmem:[#allocation7 + $0x3] sm:$0x1]
    %v60 = vld [vmem:[#allocation7 + $0x4] sm:$0x1]
    %v61 = vld [vmem:[#allocation7 + $0x5] sm:$0x1]
    %v62 = vld [vmem:[#allocation5] sm:$0xff]
    %v63 = vld [vmem:[#allocation5 + $0x8] sm:$0xff]
    %v64 = vld [vmem:[#allocation5 + $0x10] sm:$0xff]
    %v65 = vld [vmem:[#allocation5 + $0x18] sm:$0xff]
    %v66 = vld [vmem:[#allocation5 + $0x20] sm:$0xff]
    %v67 = vld [vmem:[#allocation5 + $0x28] sm:$0xff]
    %v68 = vld [vmem:[#allocation5 + $0x30] sm:$0xff]
    %v69 = vld [vmem:[#allocation5 + $0x38] sm:$0xff]
    %v70 = vld [vmem:[#allocation5 + $0x40] sm:$0xff]
    %v71 = vld [vmem:[#allocation5 + $0x48] sm:$0xff]
    %v72 = vld [vmem:[#allocation5 + $0x50] sm:$0xff]
    %v73 = vld [vmem:[#allocation5 + $0x58] sm:$0xff]
    %v74 = vld [vmem:[#allocation5 + $0x60] sm:$0xff]
    %v75 = vld [vmem:[#allocation5 + $0x68] sm:$0xff]
    %v76 = vld [vmem:[#allocation5 + $0x70] sm:$0xff]
    %v77 = vld [vmem:[#allocation5 + $0x78] sm:$0xff]
    %v78 = vld [vmem:[#allocation5 + $0x80] sm:$0xff]
    %v79 = vld [vmem:[#allocation5 + $0x88] sm:$0xff]
    %v80 = vld [vmem:[#allocation5 + $0x90] sm:$0xff]
    %v81 = vld [vmem:[#allocation5 + $0x98] sm:$0xff]
    %v82 = vld [vmem:[#allocation5 + $0xa0] sm:$0xff]
    %v83 = vld [vmem:[#allocation5 + $0xa8] sm:$0xff]
    %v84 = vld [vmem:[#allocation5 + $0xb0] sm:$0xff]
    %v85 = vld [vmem:[#allocation5 + $0xb8] sm:$0xff]
    %v86 = vld [vmem:[#allocation5 + $0xc0] sm:$0xf]
    %vm87 = vcmask 261120
    %v89 = vsel %vm87, %v54, 0
    %v92 = vsel %vm87, %v55, 0
    %94 = vmatprep.subr.mxu0 0.0
    %95 = vmatpush1.msra.mxu0 %v62
    %96 = vmatprep.subr.mxu0 0.0
    %97 = vmatpush1.msra.mxu0 %v63
    %98 = vmatprep.subr.mxu0 0.0
    %99 = vmatpush1.msra.mxu0 %v64
    %100 = vmatprep.subr.mxu0 0.0
    %101 = vmatpush1.msra.mxu0 %v65
    %102 = vmatprep.subr.mxu0 0.0
    %103 = vmatpush1.msra.mxu0 0.0
    %104 = vmatprep.subr.mxu0 0.0
    %105 = vmatpush1.msra.mxu0 0.0
    %106 = vmatprep.subr.mxu0 0.0
    %107 = vmatpush1.msra.mxu0 0.0
    %108 = vmatprep.subr.mxu0 0.0
    %109 = vmatpush1.msra.mxu0 0.0
    %110 = vmatprep.subr.mxu0 0.0
    %111 = vmatpush1.msra.mxu0 0.0
    %112 = vmatprep.subr.mxu0 0.0
    %113 = vmatpush1.msra.mxu0 0.0
    %114 = vmatprep.subr.mxu0 0.0
    %115 = vmatpush1.msra.mxu0 0.0
    %116 = vmatprep.subr.mxu0 0.0
    %117 = vmatpush1.msra.mxu0 0.0
    %118 = vmatprep.subr.mxu0 0.0
    %119 = vmatpush1.msra.mxu0 0.0
    %120 = vmatprep.subr.mxu0 0.0
    %121 = vmatpush1.msra.mxu0 0.0
    %122 = vmatprep.subr.mxu0 0.0
    %123 = vmatpush1.msra.mxu0 0.0
    %124 = vmatprep.subr.mxu0 0.0
    %125 = vmatpush1.msra.mxu0 0.0
    %126 = vmatprep.subr.mxu0 0.0
    %127 = vmatpush1.msra.mxu0 0.0
    %128 = vmatprep.subr.mxu0 0.0
    %129 = vmatpush1.msra.mxu0 0.0
    %130 = vmatprep.subr.mxu0 0.0
    %131 = vmatpush1.msra.mxu0 0.0
    %132 = vmatprep.subr.mxu0 0.0
    %133 = vmatpush1.msra.mxu0 0.0
    %134 = vmatprep.subr.mxu0 0.0
    %135 = vmatpush1.msra.mxu0 0.0
    %136 = vmatprep.subr.mxu0 0.0
    %137 = vmatpush1.msra.mxu0 0.0
    %138 = vmatprep.subr.mxu0 0.0
    %139 = vmatpush1.msra.mxu0 0.0
    %140 = vmatprep.subr.mxu0 0.0
    %141 = vmatpush1.msra.mxu0 0.0
    %142 = vmatprep.subr.mxu0 0.0
    %143 = vmatpush1.msra.mxu0 0.0
    %144 = vmatprep.subr.mxu0 0.0
    %145 = vmatpush1.msra.mxu0 0.0
    %146 = vmatprep.subr.mxu0 0.0
    %147 = vmatpush1.msra.mxu0 0.0
    %148 = vmatprep.subr.mxu0 0.0
    %149 = vmatpush1.msra.mxu0 0.0
    %150 = vmatprep.subr.mxu0 0.0
    %151 = vmatpush1.msra.mxu0 0.0
    %152 = vmatprep.subr.mxu0 0.0
    %153 = vmatpush1.msra.mxu0 0.0
    %154 = vmatprep.subr.mxu0 0.0
    %155 = vmatpush1.msra.mxu0 0.0
    %156 = vmatprep.subr.mxu0 0.0
    %157 = vmatpush1.msra.mxu0 0.0
    %158 = vmatprep.mubr.f32.mxu0 0.0
    %159 = vmatmul.mubr.f32.gmra.mrb[0].mxu0 %v89
    %v160 = vpop.f32.mrb[0].mxu0
    %v161 = vadd.f32 0.0, %v160
    %v162 = vpop.f32.mrb[0].mxu0
    %163 = vmatprep.mubr.f32.mxu0 0.0
    %164 = vmatmul.mubr.f32.gmra.mrb[0].mxu0 %v92
    %v165 = vpop.f32.mrb[0].mxu0
    %v166 = vadd.f32 0.0, %v165
    %v167 = vpop.f32.mrb[0].mxu0
    %168 = vdwg.mxu0
    %v171 = vcombine.high %v161, %v161
    %v173 = vunpack.c.l.s4 1966171168
    %v174 = vunpack.c.0.s8 %v173
    %v175 = vlaneseq
    %v176 = vshrl.u32 %v175, 7
    %v177 = vsub.s32 %v174, %v176
    %v178 = vrot.slane %v161, %v177
    %v180 = vunpack.c.l.s4 1966171168
    %v181 = vunpack.c.0.s8 %v180
    %v182 = vlaneseq
    %v183 = vshrl.u32 %v182, 7
    %v184 = vsub.s32 %v181, %v183
    %v185 = vrot.slane %v171, %v184
    %v186 = vcombine.high %v178, %v178
    %v187 = vcombine.high %v185, %v185
    %v189 = vunpack.c.l.s4 1966171168
    %v190 = vunpack.c.0.s8 %v189
    %v191 = vlaneseq
    %v192 = vshrl.u32 %v191, 7
    %v193 = vsub.s32 %v190, %v192
    %v194 = vrot.slane %v178, %v193
    %v196 = vunpack.c.l.s4 1966171168
    %v197 = vunpack.c.0.s8 %v196
    %v198 = vlaneseq
    %v199 = vshrl.u32 %v198, 7
    %v200 = vsub.s32 %v197, %v199
    %v201 = vrot.slane %v185, %v200
    %v203 = vunpack.c.l.s4 1966171168
    %v204 = vunpack.c.0.s8 %v203
    %v205 = vlaneseq
    %v206 = vshrl.u32 %v205, 7
    %v207 = vsub.s32 %v204, %v206
    %v208 = vrot.slane %v186, %v207
    %v210 = vunpack.c.l.s4 1966171168
    %v211 = vunpack.c.0.s8 %v210
    %v212 = vlaneseq
    %v213 = vshrl.u32 %v212, 7
    %v214 = vsub.s32 %v211, %v213
    %v215 = vrot.slane %v187, %v214
    %v216 = vcombine.high %v194, %v194
    %v217 = vcombine.high %v201, %v201
    %v218 = vcombine.high %v208, %v208
    %v219 = vcombine.high %v215, %v215
    %v220 = vcombine.high %v166, %v166
    %v222 = vunpack.c.l.s4 1966171168
    %v223 = vunpack.c.0.s8 %v222
    %v224 = vlaneseq
    %v225 = vshrl.u32 %v224, 7
    %v226 = vsub.s32 %v223, %v225
    %v227 = vrot.slane %v166, %v226
    %v229 = vunpack.c.l.s4 1966171168
    %v230 = vunpack.c.0.s8 %v229
    %v231 = vlaneseq
    %v232 = vshrl.u32 %v231, 7
    %v233 = vsub.s32 %v230, %v232
    %v234 = vrot.slane %v220, %v233
    %v235 = vcombine.high %v227, %v227
    %v236 = vcombine.high %v234, %v234
    %v238 = vunpack.c.l.s4 1966171168
    %v239 = vunpack.c.0.s8 %v238
    %v240 = vlaneseq
    %v241 = vshrl.u32 %v240, 7
    %v242 = vsub.s32 %v239, %v241
    %v243 = vrot.slane %v227, %v242
    %v245 = vunpack.c.l.s4 1966171168
    %v246 = vunpack.c.0.s8 %v245
    %v247 = vlaneseq
    %v248 = vshrl.u32 %v247, 7
    %v249 = vsub.s32 %v246, %v248
    %v250 = vrot.slane %v234, %v249
    %v252 = vunpack.c.l.s4 1966171168
    %v253 = vunpack.c.0.s8 %v252
    %v254 = vlaneseq
    %v255 = vshrl.u32 %v254, 7
    %v256 = vsub.s32 %v253, %v255
    %v257 = vrot.slane %v235, %v256
    %v259 = vunpack.c.l.s4 1966171168
    %v260 = vunpack.c.0.s8 %v259
    %v261 = vlaneseq
    %v262 = vshrl.u32 %v261, 7
    %v263 = vsub.s32 %v260, %v262
    %v264 = vrot.slane %v236, %v263
    %v265 = vcombine.high %v243, %v243
    %v266 = vcombine.high %v250, %v250
    %v267 = vcombine.high %v257, %v257
    %v268 = vcombine.high %v264, %v264
    %v269 = vlaneseq
    %v270 = vshrl.u32 %v269, 7
    %v271 = vsub.s32 0, %v270
    %v272 = vrot.slane %v194, %v271
    %v273 = vlaneseq
    %v274 = vshrl.u32 %v273, 7
    %v275 = vsub.s32 0, %v274
    %v276 = vrot.slane %v208, %v275
    %v277 = vlaneseq
    %v278 = vshrl.u32 %v277, 7
    %v279 = vsub.s32 0, %v278
    %v280 = vrot.slane %v216, %v279
    %v281 = vlaneseq
    %v282 = vshrl.u32 %v281, 7
    %v283 = vsub.s32 0, %v282
    %v284 = vrot.slane %v218, %v283
    %v285 = vlaneseq
    %v286 = vshrl.u32 %v285, 7
    %v287 = vsub.s32 0, %v286
    %v288 = vrot.slane %v201, %v287
    %v289 = vlaneseq
    %v290 = vshrl.u32 %v289, 7
    %v291 = vsub.s32 0, %v290
    %v292 = vrot.slane %v215, %v291
    %v293 = vlaneseq
    %v294 = vshrl.u32 %v293, 7
    %v295 = vsub.s32 0, %v294
    %v296 = vrot.slane %v217, %v295
    %v297 = vlaneseq
    %v298 = vshrl.u32 %v297, 7
    %v299 = vsub.s32 0, %v298
    %v300 = vrot.slane %v219, %v299
    %v301 = vlaneseq
    %v302 = vshrl.u32 %v301, 7
    %v303 = vsub.s32 0, %v302
    %v304 = vrot.slane %v243, %v303
    %v305 = vlaneseq
    %v306 = vshrl.u32 %v305, 7
    %v307 = vsub.s32 0, %v306
    %v308 = vrot.slane %v257, %v307
    %v309 = vlaneseq
    %v310 = vshrl.u32 %v309, 7
    %v311 = vsub.s32 0, %v310
    %v312 = vrot.slane %v265, %v311
    %v313 = vlaneseq
    %v314 = vshrl.u32 %v313, 7
    %v315 = vsub.s32 0, %v314
    %v316 = vrot.slane %v267, %v315
    %v317 = vlaneseq
    %v318 = vshrl.u32 %v317, 7
    %v319 = vsub.s32 0, %v318
    %v320 = vrot.slane %v250, %v319
    %v321 = vlaneseq
    %v322 = vshrl.u32 %v321, 7
    %v323 = vsub.s32 0, %v322
    %v324 = vrot.slane %v264, %v323
    %v325 = vlaneseq
    %v326 = vshrl.u32 %v325, 7
    %v327 = vsub.s32 0, %v326
    %v328 = vrot.slane %v266, %v327
    %v329 = vlaneseq
    %v330 = vshrl.u32 %v329, 7
    %v331 = vsub.s32 0, %v330
    %v332 = vrot.slane %v268, %v331
    %349 = vrot.lane.b32.xlu0 %v161, 96
    %v350 = vpop.permute.xlu0 %349
    %351 = vrot.lane.b32.xlu0 %v166, 96
    %v352 = vpop.permute.xlu0 %351
    %v355 = vmul.f32 %v272, %v350
    %v356 = vmul.f32 %v276, %v350
    %v357 = vmul.f32 %v280, %v350
    %v358 = vmul.f32 %v284, %v350
    %v359 = vmul.f32 %v288, %v350
    %v360 = vmul.f32 %v292, %v350
    %v361 = vmul.f32 %v296, %v350
    %v362 = vmul.f32 %v300, %v350
    %v363 = vmul.f32 %v304, %v352
    %v364 = vmul.f32 %v308, %v352
    %v365 = vmul.f32 %v312, %v352
    %v366 = vmul.f32 %v316, %v352
    %v367 = vmul.f32 %v320, %v352
    %v368 = vmul.f32 %v324, %v352
    %v369 = vmul.f32 %v328, %v352
    %v370 = vmul.f32 %v332, %v352
    %v372 = vsel %vm87, %v355, 0
    %v375 = vsel %vm87, %v356, 0
    %v378 = vsel %vm87, %v357, 0
    %v381 = vsel %vm87, %v358, 0
    %v384 = vsel %vm87, %v359, 0
    %v387 = vsel %vm87, %v360, 0
    %v390 = vsel %vm87, %v361, 0
    %v393 = vsel %vm87, %v362, 0
    %v396 = vsel %vm87, %v363, 0
    %v399 = vsel %vm87, %v364, 0
    %v402 = vsel %vm87, %v365, 0
    %v405 = vsel %vm87, %v366, 0
    %v408 = vsel %vm87, %v367, 0
    %v411 = vsel %vm87, %v368, 0
    %v414 = vsel %vm87, %v369, 0
    %v417 = vsel %vm87, %v370, 0
    %419 = vmatprep.subr.mxu0 0.0
    %420 = vmatpush1.msra.mxu0 %v82
    %421 = vmatprep.subr.mxu0 0.0
    %422 = vmatpush1.msra.mxu0 %v83
    %423 = vmatprep.subr.mxu0 0.0
    %424 = vmatpush1.msra.mxu0 %v84
    %425 = vmatprep.subr.mxu0 0.0
    %426 = vmatpush1.msra.mxu0 %v85
    %427 = vmatprep.subr.mxu0 0.0
    %428 = vmatpush1.msra.mxu0 0.0
    %429 = vmatprep.subr.mxu0 0.0
    %430 = vmatpush1.msra.mxu0 0.0
    %431 = vmatprep.subr.mxu0 0.0
    %432 = vmatpush1.msra.mxu0 0.0
    %433 = vmatprep.subr.mxu0 0.0
    %434 = vmatpush1.msra.mxu0 0.0
    %435 = vmatprep.subr.mxu0 0.0
    %436 = vmatpush1.msra.mxu0 0.0
    %437 = vmatprep.subr.mxu0 0.0
    %438 = vmatpush1.msra.mxu0 0.0
    %439 = vmatprep.subr.mxu0 0.0
    %440 = vmatpush1.msra.mxu0 0.0
    %441 = vmatprep.subr.mxu0 0.0
    %442 = vmatpush1.msra.mxu0 0.0
    %443 = vmatprep.subr.mxu0 0.0
    %444 = vmatpush1.msra.mxu0 0.0
    %445 = vmatprep.subr.mxu0 0.0
    %446 = vmatpush1.msra.mxu0 0.0
    %447 = vmatprep.subr.mxu0 0.0
    %448 = vmatpush1.msra.mxu0 0.0
    %449 = vmatprep.subr.mxu0 0.0
    %450 = vmatpush1.msra.mxu0 0.0
    %451 = vmatprep.subr.mxu0 0.0
    %452 = vmatpush1.msra.mxu0 0.0
    %453 = vmatprep.subr.mxu0 0.0
    %454 = vmatpush1.msra.mxu0 0.0
    %455 = vmatprep.subr.mxu0 0.0
    %456 = vmatpush1.msra.mxu0 0.0
    %457 = vmatprep.subr.mxu0 0.0
    %458 = vmatpush1.msra.mxu0 0.0
    %459 = vmatprep.subr.mxu0 0.0
    %460 = vmatpush1.msra.mxu0 0.0
    %461 = vmatprep.subr.mxu0 0.0
    %462 = vmatpush1.msra.mxu0 0.0
    %463 = vmatprep.subr.mxu0 0.0
    %464 = vmatpush1.msra.mxu0 0.0
    %465 = vmatprep.subr.mxu0 0.0
    %466 = vmatpush1.msra.mxu0 0.0
    %467 = vmatprep.subr.mxu0 0.0
    %468 = vmatpush1.msra.mxu0 0.0
    %469 = vmatprep.subr.mxu0 0.0
    %470 = vmatpush1.msra.mxu0 0.0
    %471 = vmatprep.subr.mxu0 0.0
    %472 = vmatpush1.msra.mxu0 0.0
    %473 = vmatprep.subr.mxu0 0.0
    %474 = vmatpush1.msra.mxu0 0.0
    %475 = vmatprep.subr.mxu0 0.0
    %476 = vmatpush1.msra.mxu0 0.0
    %477 = vmatprep.subr.mxu0 0.0
    %478 = vmatpush1.msra.mxu0 0.0
    %479 = vmatprep.subr.mxu0 0.0
    %480 = vmatpush1.msra.mxu0 0.0
    %481 = vmatprep.subr.mxu0 0.0
    %482 = vmatpush1.msra.mxu0 0.0
    %483 = vmatprep.mubr.f32.mxu0 0.0
    %484 = vmatmul.mubr.f32.gmra.mrb[0].mxu0 %v372
    %v485 = vpop.f32.mrb[0].mxu0
    %v486 = vadd.f32 0.0, %v485
    %v487 = vpop.f32.mrb[0].mxu0
    %488 = vmatprep.mubr.f32.mxu0 0.0
    %489 = vmatmul.mubr.f32.gmra.mrb[0].mxu0 %v375
    %v490 = vpop.f32.mrb[0].mxu0
    %v491 = vadd.f32 0.0, %v490
    %v492 = vpop.f32.mrb[0].mxu0
    %493 = vmatprep.mubr.f32.mxu0 0.0
    %494 = vmatmul.mubr.f32.gmra.mrb[0].mxu0 %v378
    %v495 = vpop.f32.mrb[0].mxu0
    %v496 = vadd.f32 0.0, %v495
    %v497 = vpop.f32.mrb[0].mxu0
    %498 = vmatprep.mubr.f32.mxu0 0.0
    %499 = vmatmul.mubr.f32.gmra.mrb[0].mxu0 %v381
    %v500 = vpop.f32.mrb[0].mxu0
    %v501 = vadd.f32 0.0, %v500
    %v502 = vpop.f32.mrb[0].mxu0
    %503 = vmatprep.mubr.f32.mxu0 0.0
    %504 = vmatmul.mubr.f32.gmra.mrb[0].mxu0 %v384
    %v505 = vpop.f32.mrb[0].mxu0
    %v506 = vadd.f32 0.0, %v505
    %v507 = vpop.f32.mrb[0].mxu0
    %508 = vmatprep.mubr.f32.mxu0 0.0
    %509 = vmatmul.mubr.f32.gmra.mrb[0].mxu0 %v387
    %v510 = vpop.f32.mrb[0].mxu0
    %v511 = vadd.f32 0.0, %v510
    %v512 = vpop.f32.mrb[0].mxu0
    %513 = vmatprep.mubr.f32.mxu0 0.0
    %514 = vmatmul.mubr.f32.gmra.mrb[0].mxu0 %v390
    %v515 = vpop.f32.mrb[0].mxu0
    %v516 = vadd.f32 0.0, %v515
    %v517 = vpop.f32.mrb[0].mxu0
    %518 = vmatprep.mubr.f32.mxu0 0.0
    %519 = vmatmul.mubr.f32.gmra.mrb[0].mxu0 %v393
    %v520 = vpop.f32.mrb[0].mxu0
    %v521 = vadd.f32 0.0, %v520
    %v522 = vpop.f32.mrb[0].mxu0
    %523 = vmatprep.mubr.f32.mxu0 0.0
    %524 = vmatmul.mubr.f32.gmra.mrb[0].mxu0 %v396
    %v525 = vpop.f32.mrb[0].mxu0
    %v526 = vadd.f32 0.0, %v525
    %v527 = vpop.f32.mrb[0].mxu0
    %528 = vmatprep.mubr.f32.mxu0 0.0
    %529 = vmatmul.mubr.f32.gmra.mrb[0].mxu0 %v399
    %v530 = vpop.f32.mrb[0].mxu0
    %v531 = vadd.f32 0.0, %v530
    %v532 = vpop.f32.mrb[0].mxu0
    %533 = vmatprep.mubr.f32.mxu0 0.0
    %534 = vmatmul.mubr.f32.gmra.mrb[0].mxu0 %v402
    %v535 = vpop.f32.mrb[0].mxu0
    %v536 = vadd.f32 0.0, %v535
    %v537 = vpop.f32.mrb[0].mxu0
    %538 = vmatprep.mubr.f32.mxu0 0.0
    %539 = vmatmul.mubr.f32.gmra.mrb[0].mxu0 %v405
    %v540 = vpop.f32.mrb[0].mxu0
    %v541 = vadd.f32 0.0, %v540
    %v542 = vpop.f32.mrb[0].mxu0
    %543 = vmatprep.mubr.f32.mxu0 0.0
    %544 = vmatmul.mubr.f32.gmra.mrb[0].mxu0 %v408
    %v545 = vpop.f32.mrb[0].mxu0
    %v546 = vadd.f32 0.0, %v545
    %v547 = vpop.f32.mrb[0].mxu0
    %548 = vmatprep.mubr.f32.mxu0 0.0
    %549 = vmatmul.mubr.f32.gmra.mrb[0].mxu0 %v411
    %v550 = vpop.f32.mrb[0].mxu0
    %v551 = vadd.f32 0.0, %v550
    %v552 = vpop.f32.mrb[0].mxu0
    %553 = vmatprep.mubr.f32.mxu0 0.0
    %554 = vmatmul.mubr.f32.gmra.mrb[0].mxu0 %v414
    %v555 = vpop.f32.mrb[0].mxu0
    %v556 = vadd.f32 0.0, %v555
    %v557 = vpop.f32.mrb[0].mxu0
    %558 = vmatprep.mubr.f32.mxu0 0.0
    %559 = vmatmul.mubr.f32.gmra.mrb[0].mxu0 %v417
    %v560 = vpop.f32.mrb[0].mxu0
    %v561 = vadd.f32 0.0, %v560
    %v562 = vpop.f32.mrb[0].mxu0
    %563 = vdwg.mxu0
    %vm564 = vcmask 31744
    %v565 = vsel %vm564, %v486, -inf
    %v566 = vrot.slane %v565, 4
    %v567 = vmax.f32 %v565, %v566
    %v568 = vrot.slane %v567, 2
    %v569 = vmax.f32 %v567, %v568
    %v570 = vrot.slane %v569, 1
    %v571 = vmax.f32 %v569, %v570
    %v572 = vsel %vm564, %v491, -inf
    %v573 = vrot.slane %v572, 4
    %v574 = vmax.f32 %v572, %v573
    %v575 = vrot.slane %v574, 2
    %v576 = vmax.f32 %v574, %v575
    %v577 = vrot.slane %v576, 1
    %v578 = vmax.f32 %v576, %v577
    %v579 = vsel %vm564, %v496, -inf
    %v580 = vrot.slane %v579, 4
    %v581 = vmax.f32 %v579, %v580
    %v582 = vrot.slane %v581, 2
    %v583 = vmax.f32 %v581, %v582
    %v584 = vrot.slane %v583, 1
    %v585 = vmax.f32 %v583, %v584
    %v586 = vsel %vm564, %v501, -inf
    %v587 = vrot.slane %v586, 4
    %v588 = vmax.f32 %v586, %v587
    %v589 = vrot.slane %v588, 2
    %v590 = vmax.f32 %v588, %v589
    %v591 = vrot.slane %v590, 1
    %v592 = vmax.f32 %v590, %v591
    %v593 = vsel %vm564, %v506, -inf
    %v594 = vrot.slane %v593, 4
    %v595 = vmax.f32 %v593, %v594
    %v596 = vrot.slane %v595, 2
    %v597 = vmax.f32 %v595, %v596
    %v598 = vrot.slane %v597, 1
    %v599 = vmax.f32 %v597, %v598
    %v600 = vsel %vm564, %v511, -inf
    %v601 = vrot.slane %v600, 4
    %v602 = vmax.f32 %v600, %v601
    %v603 = vrot.slane %v602, 2
    %v604 = vmax.f32 %v602, %v603
    %v605 = vrot.slane %v604, 1
    %v606 = vmax.f32 %v604, %v605
    %v607 = vsel %vm564, %v516, -inf
    %v608 = vrot.slane %v607, 4
    %v609 = vmax.f32 %v607, %v608
    %v610 = vrot.slane %v609, 2
    %v611 = vmax.f32 %v609, %v610
    %v612 = vrot.slane %v611, 1
    %v613 = vmax.f32 %v611, %v612
    %v614 = vsel %vm564, %v521, -inf
    %v615 = vrot.slane %v614, 4
    %v616 = vmax.f32 %v614, %v615
    %v617 = vrot.slane %v616, 2
    %v618 = vmax.f32 %v616, %v617
    %v619 = vrot.slane %v618, 1
    %v620 = vmax.f32 %v618, %v619
    %v621 = vsel %vm564, %v526, -inf
    %v622 = vrot.slane %v621, 4
    %v623 = vmax.f32 %v621, %v622
    %v624 = vrot.slane %v623, 2
    %v625 = vmax.f32 %v623, %v624
    %v626 = vrot.slane %v625, 1
    %v627 = vmax.f32 %v625, %v626
    %v628 = vsel %vm564, %v531, -inf
    %v629 = vrot.slane %v628, 4
    %v630 = vmax.f32 %v628, %v629
    %v631 = vrot.slane %v630, 2
    %v632 = vmax.f32 %v630, %v631
    %v633 = vrot.slane %v632, 1
    %v634 = vmax.f32 %v632, %v633
    %v635 = vsel %vm564, %v536, -inf
    %v636 = vrot.slane %v635, 4
    %v637 = vmax.f32 %v635, %v636
    %v638 = vrot.slane %v637, 2
    %v639 = vmax.f32 %v637, %v638
    %v640 = vrot.slane %v639, 1
    %v641 = vmax.f32 %v639, %v640
    %v642 = vsel %vm564, %v541, -inf
    %v643 = vrot.slane %v642, 4
    %v644 = vmax.f32 %v642, %v643
    %v645 = vrot.slane %v644, 2
    %v646 = vmax.f32 %v644, %v645
    %v647 = vrot.slane %v646, 1
    %v648 = vmax.f32 %v646, %v647
    %v649 = vsel %vm564, %v546, -inf
    %v650 = vrot.slane %v649, 4
    %v651 = vmax.f32 %v649, %v650
    %v652 = vrot.slane %v651, 2
    %v653 = vmax.f32 %v651, %v652
    %v654 = vrot.slane %v653, 1
    %v655 = vmax.f32 %v653, %v654
    %v656 = vsel %vm564, %v551, -inf
    %v657 = vrot.slane %v656, 4
    %v658 = vmax.f32 %v656, %v657
    %v659 = vrot.slane %v658, 2
    %v660 = vmax.f32 %v658, %v659
    %v661 = vrot.slane %v660, 1
    %v662 = vmax.f32 %v660, %v661
    %v663 = vsel %vm564, %v556, -inf
    %v664 = vrot.slane %v663, 4
    %v665 = vmax.f32 %v663, %v664
    %v666 = vrot.slane %v665, 2
    %v667 = vmax.f32 %v665, %v666
    %v668 = vrot.slane %v667, 1
    %v669 = vmax.f32 %v667, %v668
    %v670 = vsel %vm564, %v561, -inf
    %v671 = vrot.slane %v670, 4
    %v672 = vmax.f32 %v670, %v671
    %v673 = vrot.slane %v672, 2
    %v674 = vmax.f32 %v672, %v673
    %v675 = vrot.slane %v674, 1
    %v676 = vmax.f32 %v674, %v675
    %v677 = vsub.f32 %v486, %v571
    %v678 = vsub.f32 %v491, %v578
    %v679 = vsub.f32 %v496, %v585
    %v680 = vsub.f32 %v501, %v592
    %v681 = vsub.f32 %v506, %v599
    %v682 = vsub.f32 %v511, %v606
    %v683 = vsub.f32 %v516, %v613
    %v684 = vsub.f32 %v521, %v620
    %v685 = vsub.f32 %v526, %v627
    %v686 = vsub.f32 %v531, %v634
    %v687 = vsub.f32 %v536, %v641
    %v688 = vsub.f32 %v541, %v648
    %v689 = vsub.f32 %v546, %v655
    %v690 = vsub.f32 %v551, %v662
    %v691 = vsub.f32 %v556, %v669
    %v692 = vsub.f32 %v561, %v676
    %v693 = vmul.f32 %v677, 1.442695
    %v694 = vpow.pop %v693
    %v695 = vmul.f32 %v678, 1.442695
    %v696 = vpow.pop %v695
    %v697 = vmul.f32 %v679, 1.442695
    %v698 = vpow.pop %v697
    %v699 = vmul.f32 %v680, 1.442695
    %v700 = vpow.pop %v699
    %v701 = vmul.f32 %v681, 1.442695
    %v702 = vpow.pop %v701
    %v703 = vmul.f32 %v682, 1.442695
    %v704 = vpow.pop %v703
    %v705 = vmul.f32 %v683, 1.442695
    %v706 = vpow.pop %v705
    %v707 = vmul.f32 %v684, 1.442695
    %v708 = vpow.pop %v707
    %v709 = vmul.f32 %v685, 1.442695
    %v710 = vpow.pop %v709
    %v711 = vmul.f32 %v686, 1.442695
    %v712 = vpow.pop %v711
    %v713 = vmul.f32 %v687, 1.442695
    %v714 = vpow.pop %v713
    %v715 = vmul.f32 %v688, 1.442695
    %v716 = vpow.pop %v715
    %v717 = vmul.f32 %v689, 1.442695
    %v718 = vpow.pop %v717
    %v719 = vmul.f32 %v690, 1.442695
    %v720 = vpow.pop %v719
    %v721 = vmul.f32 %v691, 1.442695
    %v722 = vpow.pop %v721
    %v723 = vmul.f32 %v692, 1.442695
    %v724 = vpow.pop %v723
    %v725 = vsel %vm564, %v694, 0.0
    %v726 = vrot.slane %v725, 4
    %v727 = vadd.f32 %v725, %v726
    %v728 = vrot.slane %v727, 2
    %v729 = vadd.f32 %v727, %v728
    %v730 = vrot.slane %v729, 1
    %v731 = vadd.f32 %v729, %v730
    %v732 = vsel %vm564, %v696, 0.0
    %v733 = vrot.slane %v732, 4
    %v734 = vadd.f32 %v732, %v733
    %v735 = vrot.slane %v734, 2
    %v736 = vadd.f32 %v734, %v735
    %v737 = vrot.slane %v736, 1
    %v738 = vadd.f32 %v736, %v737
    %v739 = vsel %vm564, %v698, 0.0
    %v740 = vrot.slane %v739, 4
    %v741 = vadd.f32 %v739, %v740
    %v742 = vrot.slane %v741, 2
    %v743 = vadd.f32 %v741, %v742
    %v744 = vrot.slane %v743, 1
    %v745 = vadd.f32 %v743, %v744
    %v746 = vsel %vm564, %v700, 0.0
    %v747 = vrot.slane %v746, 4
    %v748 = vadd.f32 %v746, %v747
    %v749 = vrot.slane %v748, 2
    %v750 = vadd.f32 %v748, %v749
    %v751 = vrot.slane %v750, 1
    %v752 = vadd.f32 %v750, %v751
    %v753 = vsel %vm564, %v702, 0.0
    %v754 = vrot.slane %v753, 4
    %v755 = vadd.f32 %v753, %v754
    %v756 = vrot.slane %v755, 2
    %v757 = vadd.f32 %v755, %v756
    %v758 = vrot.slane %v757, 1
    %v759 = vadd.f32 %v757, %v758
    %v760 = vsel %vm564, %v704, 0.0
    %v761 = vrot.slane %v760, 4
    %v762 = vadd.f32 %v760, %v761
    %v763 = vrot.slane %v762, 2
    %v764 = vadd.f32 %v762, %v763
    %v765 = vrot.slane %v764, 1
    %v766 = vadd.f32 %v764, %v765
    %v767 = vsel %vm564, %v706, 0.0
    %v768 = vrot.slane %v767, 4
    %v769 = vadd.f32 %v767, %v768
    %v770 = vrot.slane %v769, 2
    %v771 = vadd.f32 %v769, %v770
    %v772 = vrot.slane %v771, 1
    %v773 = vadd.f32 %v771, %v772
    %v774 = vsel %vm564, %v708, 0.0
    %v775 = vrot.slane %v774, 4
    %v776 = vadd.f32 %v774, %v775
    %v777 = vrot.slane %v776, 2
    %v778 = vadd.f32 %v776, %v777
    %v779 = vrot.slane %v778, 1
    %v780 = vadd.f32 %v778, %v779
    %v781 = vsel %vm564, %v710, 0.0
    %v782 = vrot.slane %v781, 4
    %v783 = vadd.f32 %v781, %v782
    %v784 = vrot.slane %v783, 2
    %v785 = vadd.f32 %v783, %v784
    %v786 = vrot.slane %v785, 1
    %v787 = vadd.f32 %v785, %v786
    %v788 = vsel %vm564, %v712, 0.0
    %v789 = vrot.slane %v788, 4
    %v790 = vadd.f32 %v788, %v789
    %v791 = vrot.slane %v790, 2
    %v792 = vadd.f32 %v790, %v791
    %v793 = vrot.slane %v792, 1
    %v794 = vadd.f32 %v792, %v793
    %v795 = vsel %vm564, %v714, 0.0
    %v796 = vrot.slane %v795, 4
    %v797 = vadd.f32 %v795, %v796
    %v798 = vrot.slane %v797, 2
    %v799 = vadd.f32 %v797, %v798
    %v800 = vrot.slane %v799, 1
    %v801 = vadd.f32 %v799, %v800
    %v802 = vsel %vm564, %v716, 0.0
    %v803 = vrot.slane %v802, 4
    %v804 = vadd.f32 %v802, %v803
    %v805 = vrot.slane %v804, 2
    %v806 = vadd.f32 %v804, %v805
    %v807 = vrot.slane %v806, 1
    %v808 = vadd.f32 %v806, %v807
    %v809 = vsel %vm564, %v718, 0.0
    %v810 = vrot.slane %v809, 4
    %v811 = vadd.f32 %v809, %v810
    %v812 = vrot.slane %v811, 2
    %v813 = vadd.f32 %v811, %v812
    %v814 = vrot.slane %v813, 1
    %v815 = vadd.f32 %v813, %v814
    %v816 = vsel %vm564, %v720, 0.0
    %v817 = vrot.slane %v816, 4
    %v818 = vadd.f32 %v816, %v817
    %v819 = vrot.slane %v818, 2
    %v820 = vadd.f32 %v818, %v819
    %v821 = vrot.slane %v820, 1
    %v822 = vadd.f32 %v820, %v821
    %v823 = vsel %vm564, %v722, 0.0
    %v824 = vrot.slane %v823, 4
    %v825 = vadd.f32 %v823, %v824
    %v826 = vrot.slane %v825, 2
    %v827 = vadd.f32 %v825, %v826
    %v828 = vrot.slane %v827, 1
    %v829 = vadd.f32 %v827, %v828
    %v830 = vsel %vm564, %v724, 0.0
    %v831 = vrot.slane %v830, 4
    %v832 = vadd.f32 %v830, %v831
    %v833 = vrot.slane %v832, 2
    %v834 = vadd.f32 %v832, %v833
    %v835 = vrot.slane %v834, 1
    %v836 = vadd.f32 %v834, %v835
    %v837 = vrcp.pop %v731
    %v838 = vmul.f32 %v694, %v837
    %v839 = vrcp.pop %v738
    %v840 = vmul.f32 %v696, %v839
    %v841 = vrcp.pop %v745
    %v842 = vmul.f32 %v698, %v841
    %v843 = vrcp.pop %v752
    %v844 = vmul.f32 %v700, %v843
    %v845 = vrcp.pop %v759
    %v846 = vmul.f32 %v702, %v845
    %v847 = vrcp.pop %v766
    %v848 = vmul.f32 %v704, %v847
    %v849 = vrcp.pop %v773
    %v850 = vmul.f32 %v706, %v849
    %v851 = vrcp.pop %v780
    %v852 = vmul.f32 %v708, %v851
    %v853 = vrcp.pop %v787
    %v854 = vmul.f32 %v710, %v853
    %v855 = vrcp.pop %v794
    %v856 = vmul.f32 %v712, %v855
    %v857 = vrcp.pop %v801
    %v858 = vmul.f32 %v714, %v857
    %v859 = vrcp.pop %v808
    %v860 = vmul.f32 %v716, %v859
    %v861 = vrcp.pop %v815
    %v862 = vmul.f32 %v718, %v861
    %v863 = vrcp.pop %v822
    %v864 = vmul.f32 %v720, %v863
    %v865 = vrcp.pop %v829
    %v866 = vmul.f32 %v722, %v865
    %v867 = vrcp.pop %v836
    %v868 = vmul.f32 %v724, %v867
    %v870 = vsel %vm564, %v838, 0
    %v873 = vsel %vm564, %v840, 0
    %v876 = vsel %vm564, %v842, 0
    %v879 = vsel %vm564, %v844, 0
    %v882 = vsel %vm564, %v846, 0
    %v885 = vsel %vm564, %v848, 0
    %v888 = vsel %vm564, %v850, 0
    %v891 = vsel %vm564, %v852, 0
    %v894 = vsel %vm564, %v854, 0
    %v897 = vsel %vm564, %v856, 0
    %v900 = vsel %vm564, %v858, 0
    %v903 = vsel %vm564, %v860, 0
    %v906 = vsel %vm564, %v862, 0
    %v909 = vsel %vm564, %v864, 0
    %v912 = vsel %vm564, %v866, 0
    %v915 = vsel %vm564, %v868, 0
    %vm917 = vcmask 1043456
    %v919 = vsel %vm917, %v86, 0
    %921 = vmatprep.subr.mxu0 0.0
    %922 = vmatpush1.msra.mxu0 %v919
    %923 = vmatprep.subr.mxu0 0.0
    %924 = vmatpush1.msra.mxu0 0.0
    %925 = vmatprep.subr.mxu0 0.0
    %926 = vmatpush1.msra.mxu0 0.0
    %927 = vmatprep.subr.mxu0 0.0
    %928 = vmatpush1.msra.mxu0 0.0
    %929 = vmatprep.subr.mxu0 0.0
    %930 = vmatpush1.msra.mxu0 0.0
    %931 = vmatprep.subr.mxu0 0.0
    %932 = vmatpush1.msra.mxu0 0.0
    %933 = vmatprep.subr.mxu0 0.0
    %934 = vmatpush1.msra.mxu0 0.0
    %935 = vmatprep.subr.mxu0 0.0
    %936 = vmatpush1.msra.mxu0 0.0
    %937 = vmatprep.subr.mxu0 0.0
    %938 = vmatpush1.msra.mxu0 0.0
    %939 = vmatprep.subr.mxu0 0.0
    %940 = vmatpush1.msra.mxu0 0.0
    %941 = vmatprep.subr.mxu0 0.0
    %942 = vmatpush1.msra.mxu0 0.0
    %943 = vmatprep.subr.mxu0 0.0
    %944 = vmatpush1.msra.mxu0 0.0
    %945 = vmatprep.subr.mxu0 0.0
    %946 = vmatpush1.msra.mxu0 0.0
    %947 = vmatprep.subr.mxu0 0.0
    %948 = vmatpush1.msra.mxu0 0.0
    %949 = vmatprep.subr.mxu0 0.0
    %950 = vmatpush1.msra.mxu0 0.0
    %951 = vmatprep.subr.mxu0 0.0
    %952 = vmatpush1.msra.mxu0 0.0
    %953 = vmatprep.subr.mxu0 0.0
    %954 = vmatpush1.msra.mxu0 0.0
    %955 = vmatprep.subr.mxu0 0.0
    %956 = vmatpush1.msra.mxu0 0.0
    %957 = vmatprep.subr.mxu0 0.0
    %958 = vmatpush1.msra.mxu0 0.0
    %959 = vmatprep.subr.mxu0 0.0
    %960 = vmatpush1.msra.mxu0 0.0
    %961 = vmatprep.subr.mxu0 0.0
    %962 = vmatpush1.msra.mxu0 0.0
    %963 = vmatprep.subr.mxu0 0.0
    %964 = vmatpush1.msra.mxu0 0.0
    %965 = vmatprep.subr.mxu0 0.0
    %966 = vmatpush1.msra.mxu0 0.0
    %967 = vmatprep.subr.mxu0 0.0
    %968 = vmatpush1.msra.mxu0 0.0
    %969 = vmatprep.subr.mxu0 0.0
    %970 = vmatpush1.msra.mxu0 0.0
    %971 = vmatprep.subr.mxu0 0.0
    %972 = vmatpush1.msra.mxu0 0.0
    %973 = vmatprep.subr.mxu0 0.0
    %974 = vmatpush1.msra.mxu0 0.0
    %975 = vmatprep.subr.mxu0 0.0
    %976 = vmatpush1.msra.mxu0 0.0
    %977 = vmatprep.subr.mxu0 0.0
    %978 = vmatpush1.msra.mxu0 0.0
    %979 = vmatprep.subr.mxu0 0.0
    %980 = vmatpush1.msra.mxu0 0.0
    %981 = vmatprep.subr.mxu0 0.0
    %982 = vmatpush1.msra.mxu0 0.0
    %983 = vmatprep.subr.mxu0 0.0
    %984 = vmatpush1.msra.mxu0 0.0
    %985 = vmatprep.mubr.f32.mxu0 0.0
    %986 = vmatmul.mubr.f32.gmra.mrb[0].mxu0 %v870
    %v987 = vpop.f32.mrb[0].mxu0
    %v988 = vadd.f32 0.0, %v987
    %v989 = vpop.f32.mrb[0].mxu0
    %990 = vmatprep.mubr.f32.mxu0 0.0
    %991 = vmatmul.mubr.f32.gmra.mrb[0].mxu0 %v873
    %v992 = vpop.f32.mrb[0].mxu0
    %v993 = vadd.f32 0.0, %v992
    %v994 = vpop.f32.mrb[0].mxu0
    %995 = vmatprep.mubr.f32.mxu0 0.0
    %996 = vmatmul.mubr.f32.gmra.mrb[0].mxu0 %v876
    %v997 = vpop.f32.mrb[0].mxu0
    %v998 = vadd.f32 0.0, %v997
    %v999 = vpop.f32.mrb[0].mxu0
    %1000 = vmatprep.mubr.f32.mxu0 0.0
    %1001 = vmatmul.mubr.f32.gmra.mrb[0].mxu0 %v879
    %v1002 = vpop.f32.mrb[0].mxu0
    %v1003 = vadd.f32 0.0, %v1002
    %v1004 = vpop.f32.mrb[0].mxu0
    %1005 = vmatprep.mubr.f32.mxu0 0.0
    %1006 = vmatmul.mubr.f32.gmra.mrb[0].mxu0 %v882
    %v1007 = vpop.f32.mrb[0].mxu0
    %v1008 = vadd.f32 0.0, %v1007
    %v1009 = vpop.f32.mrb[0].mxu0
    %1010 = vmatprep.mubr.f32.mxu0 0.0
    %1011 = vmatmul.mubr.f32.gmra.mrb[0].mxu0 %v885
    %v1012 = vpop.f32.mrb[0].mxu0
    %v1013 = vadd.f32 0.0, %v1012
    %v1014 = vpop.f32.mrb[0].mxu0
    %1015 = vmatprep.mubr.f32.mxu0 0.0
    %1016 = vmatmul.mubr.f32.gmra.mrb[0].mxu0 %v888
    %v1017 = vpop.f32.mrb[0].mxu0
    %v1018 = vadd.f32 0.0, %v1017
    %v1019 = vpop.f32.mrb[0].mxu0
    %1020 = vmatprep.mubr.f32.mxu0 0.0
    %1021 = vmatmul.mubr.f32.gmra.mrb[0].mxu0 %v891
    %v1022 = vpop.f32.mrb[0].mxu0
    %v1023 = vadd.f32 0.0, %v1022
    %v1024 = vpop.f32.mrb[0].mxu0
    %1025 = vmatprep.mubr.f32.mxu0 0.0
    %1026 = vmatmul.mubr.f32.gmra.mrb[0].mxu0 %v894
    %v1027 = vpop.f32.mrb[0].mxu0
    %v1028 = vadd.f32 0.0, %v1027
    %v1029 = vpop.f32.mrb[0].mxu0
    %1030 = vmatprep.mubr.f32.mxu0 0.0
    %1031 = vmatmul.mubr.f32.gmra.mrb[0].mxu0 %v897
    %v1032 = vpop.f32.mrb[0].mxu0
    %v1033 = vadd.f32 0.0, %v1032
    %v1034 = vpop.f32.mrb[0].mxu0
    %1035 = vmatprep.mubr.f32.mxu0 0.0
    %1036 = vmatmul.mubr.f32.gmra.mrb[0].mxu0 %v900
    %v1037 = vpop.f32.mrb[0].mxu0
    %v1038 = vadd.f32 0.0, %v1037
    %v1039 = vpop.f32.mrb[0].mxu0
    %1040 = vmatprep.mubr.f32.mxu0 0.0
    %1041 = vmatmul.mubr.f32.gmra.mrb[0].mxu0 %v903
    %v1042 = vpop.f32.mrb[0].mxu0
    %v1043 = vadd.f32 0.0, %v1042
    %v1044 = vpop.f32.mrb[0].mxu0
    %1045 = vmatprep.mubr.f32.mxu0 0.0
    %1046 = vmatmul.mubr.f32.gmra.mrb[0].mxu0 %v906
    %v1047 = vpop.f32.mrb[0].mxu0
    %v1048 = vadd.f32 0.0, %v1047
    %v1049 = vpop.f32.mrb[0].mxu0
    %1050 = vmatprep.mubr.f32.mxu0 0.0
    %1051 = vmatmul.mubr.f32.gmra.mrb[0].mxu0 %v909
    %v1052 = vpop.f32.mrb[0].mxu0
    %v1053 = vadd.f32 0.0, %v1052
    %v1054 = vpop.f32.mrb[0].mxu0
    %1055 = vmatprep.mubr.f32.mxu0 0.0
    %1056 = vmatmul.mubr.f32.gmra.mrb[0].mxu0 %v912
    %v1057 = vpop.f32.mrb[0].mxu0
    %v1058 = vadd.f32 0.0, %v1057
    %v1059 = vpop.f32.mrb[0].mxu0
    %1060 = vmatprep.mubr.f32.mxu0 0.0
    %1061 = vmatmul.mubr.f32.gmra.mrb[0].mxu0 %v915
    %v1062 = vpop.f32.mrb[0].mxu0
    %v1063 = vadd.f32 0.0, %v1062
    %v1064 = vpop.f32.mrb[0].mxu0
    %1065 = vdwg.mxu0
    %1066 = vrot.lane.b32.xlu0 %v161, 64
    %v1067 = vpop.permute.xlu0 %1066
    %1068 = vrot.lane.b32.xlu0 %v166, 64
    %v1069 = vpop.permute.xlu0 %1068
    %v1072 = vmul.f32 %v988, %v1067
    %v1073 = vmul.f32 %v993, %v1067
    %v1074 = vmul.f32 %v998, %v1067
    %v1075 = vmul.f32 %v1003, %v1067
    %v1076 = vmul.f32 %v1008, %v1067
    %v1077 = vmul.f32 %v1013, %v1067
    %v1078 = vmul.f32 %v1018, %v1067
    %v1079 = vmul.f32 %v1023, %v1067
    %v1080 = vmul.f32 %v1028, %v1069
    %v1081 = vmul.f32 %v1033, %v1069
    %v1082 = vmul.f32 %v1038, %v1069
    %v1083 = vmul.f32 %v1043, %v1069
    %v1084 = vmul.f32 %v1048, %v1069
    %v1085 = vmul.f32 %v1053, %v1069
    %v1086 = vmul.f32 %v1058, %v1069
    %v1087 = vmul.f32 %v1063, %v1069
    %v1088 = vsel %vm87, %v1072, 0.0
    %v1089 = vrot.slane %v1088, 4
    %v1090 = vadd.f32 %v1088, %v1089
    %v1091 = vrot.slane %v1090, 2
    %v1092 = vadd.f32 %v1090, %v1091
    %v1093 = vrot.slane %v1092, 1
    %v1094 = vadd.f32 %v1092, %v1093
    %v1095 = vsel %vm87, %v1073, 0.0
    %v1096 = vrot.slane %v1095, 4
    %v1097 = vadd.f32 %v1095, %v1096
    %v1098 = vrot.slane %v1097, 2
    %v1099 = vadd.f32 %v1097, %v1098
    %v1100 = vrot.slane %v1099, 1
    %v1101 = vadd.f32 %v1099, %v1100
    %v1102 = vsel %vm87, %v1074, 0.0
    %v1103 = vrot.slane %v1102, 4
    %v1104 = vadd.f32 %v1102, %v1103
    %v1105 = vrot.slane %v1104, 2
    %v1106 = vadd.f32 %v1104, %v1105
    %v1107 = vrot.slane %v1106, 1
    %v1108 = vadd.f32 %v1106, %v1107
    %v1109 = vsel %vm87, %v1075, 0.0
    %v1110 = vrot.slane %v1109, 4
    %v1111 = vadd.f32 %v1109, %v1110
    %v1112 = vrot.slane %v1111, 2
    %v1113 = vadd.f32 %v1111, %v1112
    %v1114 = vrot.slane %v1113, 1
    %v1115 = vadd.f32 %v1113, %v1114
    %v1116 = vsel %vm87, %v1076, 0.0
    %v1117 = vrot.slane %v1116, 4
    %v1118 = vadd.f32 %v1116, %v1117
    %v1119 = vrot.slane %v1118, 2
    %v1120 = vadd.f32 %v1118, %v1119
    %v1121 = vrot.slane %v1120, 1
    %v1122 = vadd.f32 %v1120, %v1121
    %v1123 = vsel %vm87, %v1077, 0.0
    %v1124 = vrot.slane %v1123, 4
    %v1125 = vadd.f32 %v1123, %v1124
    %v1126 = vrot.slane %v1125, 2
    %v1127 = vadd.f32 %v1125, %v1126
    %v1128 = vrot.slane %v1127, 1
    %v1129 = vadd.f32 %v1127, %v1128
    %v1130 = vsel %vm87, %v1078, 0.0
    %v1131 = vrot.slane %v1130, 4
    %v1132 = vadd.f32 %v1130, %v1131
    %v1133 = vrot.slane %v1132, 2
    %v1134 = vadd.f32 %v1132, %v1133
    %v1135 = vrot.slane %v1134, 1
    %v1136 = vadd.f32 %v1134, %v1135
    %v1137 = vsel %vm87, %v1079, 0.0
    %v1138 = vrot.slane %v1137, 4
    %v1139 = vadd.f32 %v1137, %v1138
    %v1140 = vrot.slane %v1139, 2
    %v1141 = vadd.f32 %v1139, %v1140
    %v1142 = vrot.slane %v1141, 1
    %v1143 = vadd.f32 %v1141, %v1142
    %v1144 = vsel %vm87, %v1080, 0.0
    %v1145 = vrot.slane %v1144, 4
    %v1146 = vadd.f32 %v1144, %v1145
    %v1147 = vrot.slane %v1146, 2
    %v1148 = vadd.f32 %v1146, %v1147
    %v1149 = vrot.slane %v1148, 1
    %v1150 = vadd.f32 %v1148, %v1149
    %v1151 = vsel %vm87, %v1081, 0.0
    %v1152 = vrot.slane %v1151, 4
    %v1153 = vadd.f32 %v1151, %v1152
    %v1154 = vrot.slane %v1153, 2
    %v1155 = vadd.f32 %v1153, %v1154
    %v1156 = vrot.slane %v1155, 1
    %v1157 = vadd.f32 %v1155, %v1156
    %v1158 = vsel %vm87, %v1082, 0.0
    %v1159 = vrot.slane %v1158, 4
    %v1160 = vadd.f32 %v1158, %v1159
    %v1161 = vrot.slane %v1160, 2
    %v1162 = vadd.f32 %v1160, %v1161
    %v1163 = vrot.slane %v1162, 1
    %v1164 = vadd.f32 %v1162, %v1163
    %v1165 = vsel %vm87, %v1083, 0.0
    %v1166 = vrot.slane %v1165, 4
    %v1167 = vadd.f32 %v1165, %v1166
    %v1168 = vrot.slane %v1167, 2
    %v1169 = vadd.f32 %v1167, %v1168
    %v1170 = vrot.slane %v1169, 1
    %v1171 = vadd.f32 %v1169, %v1170
    %v1172 = vsel %vm87, %v1084, 0.0
    %v1173 = vrot.slane %v1172, 4
    %v1174 = vadd.f32 %v1172, %v1173
    %v1175 = vrot.slane %v1174, 2
    %v1176 = vadd.f32 %v1174, %v1175
    %v1177 = vrot.slane %v1176, 1
    %v1178 = vadd.f32 %v1176, %v1177
    %v1179 = vsel %vm87, %v1085, 0.0
    %v1180 = vrot.slane %v1179, 4
    %v1181 = vadd.f32 %v1179, %v1180
    %v1182 = vrot.slane %v1181, 2
    %v1183 = vadd.f32 %v1181, %v1182
    %v1184 = vrot.slane %v1183, 1
    %v1185 = vadd.f32 %v1183, %v1184
    %v1186 = vsel %vm87, %v1086, 0.0
    %v1187 = vrot.slane %v1186, 4
    %v1188 = vadd.f32 %v1186, %v1187
    %v1189 = vrot.slane %v1188, 2
    %v1190 = vadd.f32 %v1188, %v1189
    %v1191 = vrot.slane %v1190, 1
    %v1192 = vadd.f32 %v1190, %v1191
    %v1193 = vsel %vm87, %v1087, 0.0
    %v1194 = vrot.slane %v1193, 4
    %v1195 = vadd.f32 %v1193, %v1194
    %v1196 = vrot.slane %v1195, 2
    %v1197 = vadd.f32 %v1195, %v1196
    %v1198 = vrot.slane %v1197, 1
    %v1199 = vadd.f32 %v1197, %v1198
    %vm1216 = vcmask 1041409
    %v1217 = vsel %vm1216, %v1101, %v1094
    %vm1218 = vcmask 1042434
    %v1219 = vsel %vm1218, %v1108, %v1217
    %vm1220 = vcmask 1043459
    %v1221 = vsel %vm1220, %v1115, %v1219
    %vm1222 = vcmask 1044484
    %v1223 = vsel %vm1222, %v1122, %v1221
    %vm1224 = vcmask 1045509
    %v1225 = vsel %vm1224, %v1129, %v1223
    %vm1226 = vcmask 1046534
    %v1227 = vsel %vm1226, %v1136, %v1225
    %vm1228 = vcmask 1047559
    %v1229 = vsel %vm1228, %v1143, %v1227
    %v1230 = vsel %vm1216, %v1157, %v1150
    %v1231 = vsel %vm1218, %v1164, %v1230
    %v1232 = vsel %vm1220, %v1171, %v1231
    %v1233 = vsel %vm1222, %v1178, %v1232
    %v1234 = vsel %vm1224, %v1185, %v1233
    %v1235 = vsel %vm1226, %v1192, %v1234
    %v1236 = vsel %vm1228, %v1199, %v1235
    %v1237 = vsel %vm87, %v1229, 0
    %v1239 = vsel %vm87, %v1236, 0
    %1241 = vmatprep.subr.mxu0 0.0
    %1242 = vmatpush1.msra.mxu0 %v66
    %1243 = vmatprep.subr.mxu0 0.0
    %1244 = vmatpush1.msra.mxu0 %v67
    %1245 = vmatprep.subr.mxu0 0.0
    %1246 = vmatpush1.msra.mxu0 %v68
    %1247 = vmatprep.subr.mxu0 0.0
    %1248 = vmatpush1.msra.mxu0 %v69
    %1249 = vmatprep.subr.mxu0 0.0
    %1250 = vmatpush1.msra.mxu0 0.0
    %1251 = vmatprep.subr.mxu0 0.0
    %1252 = vmatpush1.msra.mxu0 0.0
    %1253 = vmatprep.subr.mxu0 0.0
    %1254 = vmatpush1.msra.mxu0 0.0
    %1255 = vmatprep.subr.mxu0 0.0
    %1256 = vmatpush1.msra.mxu0 0.0
    %1257 = vmatprep.subr.mxu0 0.0
    %1258 = vmatpush1.msra.mxu0 0.0
    %1259 = vmatprep.subr.mxu0 0.0
    %1260 = vmatpush1.msra.mxu0 0.0
    %1261 = vmatprep.subr.mxu0 0.0
    %1262 = vmatpush1.msra.mxu0 0.0
    %1263 = vmatprep.subr.mxu0 0.0
    %1264 = vmatpush1.msra.mxu0 0.0
    %1265 = vmatprep.subr.mxu0 0.0
    %1266 = vmatpush1.msra.mxu0 0.0
    %1267 = vmatprep.subr.mxu0 0.0
    %1268 = vmatpush1.msra.mxu0 0.0
    %1269 = vmatprep.subr.mxu0 0.0
    %1270 = vmatpush1.msra.mxu0 0.0
    %1271 = vmatprep.subr.mxu0 0.0
    %1272 = vmatpush1.msra.mxu0 0.0
    %1273 = vmatprep.subr.mxu0 0.0
    %1274 = vmatpush1.msra.mxu0 0.0
    %1275 = vmatprep.subr.mxu0 0.0
    %1276 = vmatpush1.msra.mxu0 0.0
    %1277 = vmatprep.subr.mxu0 0.0
    %1278 = vmatpush1.msra.mxu0 0.0
    %1279 = vmatprep.subr.mxu0 0.0
    %1280 = vmatpush1.msra.mxu0 0.0
    %1281 = vmatprep.subr.mxu0 0.0
    %1282 = vmatpush1.msra.mxu0 0.0
    %1283 = vmatprep.subr.mxu0 0.0
    %1284 = vmatpush1.msra.mxu0 0.0
    %1285 = vmatprep.subr.mxu0 0.0
    %1286 = vmatpush1.msra.mxu0 0.0
    %1287 = vmatprep.subr.mxu0 0.0
    %1288 = vmatpush1.msra.mxu0 0.0
    %1289 = vmatprep.subr.mxu0 0.0
    %1290 = vmatpush1.msra.mxu0 0.0
    %1291 = vmatprep.subr.mxu0 0.0
    %1292 = vmatpush1.msra.mxu0 0.0
    %1293 = vmatprep.subr.mxu0 0.0
    %1294 = vmatpush1.msra.mxu0 0.0
    %1295 = vmatprep.subr.mxu0 0.0
    %1296 = vmatpush1.msra.mxu0 0.0
    %1297 = vmatprep.subr.mxu0 0.0
    %1298 = vmatpush1.msra.mxu0 0.0
    %1299 = vmatprep.subr.mxu0 0.0
    %1300 = vmatpush1.msra.mxu0 0.0
    %1301 = vmatprep.subr.mxu0 0.0
    %1302 = vmatpush1.msra.mxu0 0.0
    %1303 = vmatprep.subr.mxu0 0.0
    %1304 = vmatpush1.msra.mxu0 0.0
    %1305 = vmatprep.mubr.f32.mxu0 0.0
    %1306 = vmatmul.mubr.f32.gmra.mrb[0].mxu0 %v1237
    %v1307 = vpop.f32.mrb[0].mxu0
    %v1308 = vadd.f32 0.0, %v1307
    %v1309 = vpop.f32.mrb[0].mxu0
    %1310 = vmatprep.mubr.f32.mxu0 0.0
    %1311 = vmatmul.mubr.f32.gmra.mrb[0].mxu0 %v1239
    %v1312 = vpop.f32.mrb[0].mxu0
    %v1313 = vadd.f32 0.0, %v1312
    %v1314 = vpop.f32.mrb[0].mxu0
    %1315 = vdwg.mxu0
    %v1316 = vadd.f32 %v54, %v1308
    %v1317 = vadd.f32 %v55, %v1313
    %v1318 = vsel %vm87, %v1316, 0.0
    %1319 = vadd.xlane.f32.xlu0 %v1318
    %v1320 = vpop.xlane.xlu0 %1319
    %v1321 = vsel %vm87, %v1317, 0.0
    %1322 = vadd.xlane.f32.xlu0 %v1321
    %v1323 = vpop.xlane.xlu0 %1322
    %v1324 = vrcp.pop 32.0
    %v1325 = vmul.f32 %v1320, %v1324
    %v1326 = vmul.f32 %v1323, %v1324
    %v1327 = vsub.f32 %v1316, %v1325
    %v1328 = vsub.f32 %v1317, %v1326
    %v1329 = vmul.f32 %v1327, %v1327
    %v1330 = vmul.f32 %v1328, %v1328
    %v1331 = vsel %vm87, %v1329, 0.0
    %1332 = vadd.xlane.f32.xlu0 %v1331
    %v1333 = vpop.xlane.xlu0 %1332
    %v1334 = vsel %vm87, %v1330, 0.0
    %1335 = vadd.xlane.f32.xlu0 %v1334
    %v1336 = vpop.xlane.xlu0 %1335
    %v1337 = vmul.f32 %v1333, %v1324
    %v1338 = vmul.f32 %v1336, %v1324
    %v1339 = vadd.f32 %v1337, 1e-05
    %v1340 = vadd.f32 %v1338, 1e-05
    %v1341 = vrsqrt.pop %v1339
    %v1342 = vrsqrt.pop %v1340
    %v1343 = vmul.f32 %v1327, %v1341
    %v1344 = vmul.f32 %v1328, %v1342
    %v1345 = vlaneseq
    %v1346 = vshrl.u32 %v1345, 7
    %v1347 = vsub.s32 0, %v1346
    %v1348 = vrot.slane %v56, %v1347
    %v1349 = vmul.f32 %v1343, %v1348
    %v1350 = vmul.f32 %v1344, %v1348
    %v1351 = vlaneseq
    %v1352 = vshrl.u32 %v1351, 7
    %v1353 = vsub.s32 0, %v1352
    %v1354 = vrot.slane %v57, %v1353
    %v1355 = vadd.f32 %v1349, %v1354
    %v1356 = vadd.f32 %v1350, %v1354
    %v1357 = vlaneseq
    %v1358 = vshrl.u32 %v1357, 7
    %v1359 = vsub.s32 0, %v1358
    %v1360 = vrot.slane %v58, %v1359
    %v1362 = vsel %vm87, %v1355, 0
    %v1365 = vsel %vm87, %v1356, 0
    %1367 = vmatprep.subr.mxu0 0.0
    %1368 = vmatpush1.msra.mxu0 %v70
    %1369 = vmatprep.subr.mxu0 0.0
    %1370 = vmatpush1.msra.mxu0 %v71
    %1371 = vmatprep.subr.mxu0 0.0
    %1372 = vmatpush1.msra.mxu0 %v72
    %1373 = vmatprep.subr.mxu0 0.0
    %1374 = vmatpush1.msra.mxu0 %v73
    %1375 = vmatprep.subr.mxu0 0.0
    %1376 = vmatpush1.msra.mxu0 0.0
    %1377 = vmatprep.subr.mxu0 0.0
    %1378 = vmatpush1.msra.mxu0 0.0
    %1379 = vmatprep.subr.mxu0 0.0
    %1380 = vmatpush1.msra.mxu0 0.0
    %1381 = vmatprep.subr.mxu0 0.0
    %1382 = vmatpush1.msra.mxu0 0.0
    %1383 = vmatprep.subr.mxu0 0.0
    %1384 = vmatpush1.msra.mxu0 0.0
    %1385 = vmatprep.subr.mxu0 0.0
    %1386 = vmatpush1.msra.mxu0 0.0
    %1387 = vmatprep.subr.mxu0 0.0
    %1388 = vmatpush1.msra.mxu0 0.0
    %1389 = vmatprep.subr.mxu0 0.0
    %1390 = vmatpush1.msra.mxu0 0.0
    %1391 = vmatprep.subr.mxu0 0.0
    %1392 = vmatpush1.msra.mxu0 0.0
    %1393 = vmatprep.subr.mxu0 0.0
    %1394 = vmatpush1.msra.mxu0 0.0
    %1395 = vmatprep.subr.mxu0 0.0
    %1396 = vmatpush1.msra.mxu0 0.0
    %1397 = vmatprep.subr.mxu0 0.0
    %1398 = vmatpush1.msra.mxu0 0.0
    %1399 = vmatprep.subr.mxu0 0.0
    %1400 = vmatpush1.msra.mxu0 0.0
    %1401 = vmatprep.subr.mxu0 0.0
    %1402 = vmatpush1.msra.mxu0 0.0
    %1403 = vmatprep.subr.mxu0 0.0
    %1404 = vmatpush1.msra.mxu0 0.0
    %1405 = vmatprep.subr.mxu0 0.0
    %1406 = vmatpush1.msra.mxu0 0.0
    %1407 = vmatprep.subr.mxu0 0.0
    %1408 = vmatpush1.msra.mxu0 0.0
    %1409 = vmatprep.subr.mxu0 0.0
    %1410 = vmatpush1.msra.mxu0 0.0
    %1411 = vmatprep.subr.mxu0 0.0
    %1412 = vmatpush1.msra.mxu0 0.0
    %1413 = vmatprep.subr.mxu0 0.0
    %1414 = vmatpush1.msra.mxu0 0.0
    %1415 = vmatprep.subr.mxu0 0.0
    %1416 = vmatpush1.msra.mxu0 0.0
    %1417 = vmatprep.subr.mxu0 0.0
    %1418 = vmatpush1.msra.mxu0 0.0
    %1419 = vmatprep.subr.mxu0 0.0
    %1420 = vmatpush1.msra.mxu0 0.0
    %1421 = vmatprep.subr.mxu0 0.0
    %1422 = vmatpush1.msra.mxu0 0.0
    %1423 = vmatprep.subr.mxu0 0.0
    %1424 = vmatpush1.msra.mxu0 0.0
    %1425 = vmatprep.subr.mxu0 0.0
    %1426 = vmatpush1.msra.mxu0 0.0
    %1427 = vmatprep.subr.mxu0 0.0
    %1428 = vmatpush1.msra.mxu0 0.0
    %1429 = vmatprep.subr.mxu0 0.0
    %1430 = vmatpush1.msra.mxu0 0.0
    %1431 = vmatprep.mubr.f32.mxu0 0.0
    %1432 = vmatmul.mubr.f32.gmra.mrb[0].mxu0 %v1362
    %v1433 = vpop.f32.mrb[0].mxu0
    %v1434 = vadd.f32 %v1360, %v1433
    %v1435 = vpop.f32.mrb[0].mxu0
    %1436 = vmatprep.mubr.f32.mxu0 0.0
    %1437 = vmatmul.mubr.f32.gmra.mrb[0].mxu0 %v1365
    %v1438 = vpop.f32.mrb[0].mxu0
    %v1439 = vadd.f32 %v1360, %v1438
    %v1440 = vpop.f32.mrb[0].mxu0
    %1441 = vdwg.mxu0
    %v1442 = vmul.f32 %v1434, 0.5
    %v1443 = vmul.f32 %v1439, 0.5
    %v1444 = vmul.f32 %v1434, 0.70710677
    %v1445 = vmul.f32 %v1439, 0.70710677
    %v1446 = verf.f32.pop %v1444
    %v1447 = verf.f32.pop %v1445
    %v1448 = vadd.f32 %v1446, 1.0
    %v1449 = vadd.f32 %v1447, 1.0
    %v1450 = vmul.f32 %v1442, %v1448
    %v1451 = vmul.f32 %v1443, %v1449
    %v1452 = vlaneseq
    %v1453 = vshrl.u32 %v1452, 7
    %v1454 = vsub.s32 0, %v1453
    %v1455 = vrot.slane %v59, %v1454
    %vm1456 = vcmask 523264
    %v1458 = vsel %vm1456, %v1450, 0
    %v1461 = vsel %vm1456, %v1451, 0
    %1463 = vmatprep.subr.mxu0 0.0
    %1464 = vmatpush1.msra.mxu0 %v74
    %1465 = vmatprep.subr.mxu0 0.0
    %1466 = vmatpush1.msra.mxu0 %v75
    %1467 = vmatprep.subr.mxu0 0.0
    %1468 = vmatpush1.msra.mxu0 %v76
    %1469 = vmatprep.subr.mxu0 0.0
    %1470 = vmatpush1.msra.mxu0 %v77
    %1471 = vmatprep.subr.mxu0 0.0
    %1472 = vmatpush1.msra.mxu0 %v78
    %1473 = vmatprep.subr.mxu0 0.0
    %1474 = vmatpush1.msra.mxu0 %v79
    %1475 = vmatprep.subr.mxu0 0.0
    %1476 = vmatpush1.msra.mxu0 %v80
    %1477 = vmatprep.subr.mxu0 0.0
    %1478 = vmatpush1.msra.mxu0 %v81
    %1479 = vmatprep.subr.mxu0 0.0
    %1480 = vmatpush1.msra.mxu0 0.0
    %1481 = vmatprep.subr.mxu0 0.0
    %1482 = vmatpush1.msra.mxu0 0.0
    %1483 = vmatprep.subr.mxu0 0.0
    %1484 = vmatpush1.msra.mxu0 0.0
    %1485 = vmatprep.subr.mxu0 0.0
    %1486 = vmatpush1.msra.mxu0 0.0
    %1487 = vmatprep.subr.mxu0 0.0
    %1488 = vmatpush1.msra.mxu0 0.0
    %1489 = vmatprep.subr.mxu0 0.0
    %1490 = vmatpush1.msra.mxu0 0.0
    %1491 = vmatprep.subr.mxu0 0.0
    %1492 = vmatpush1.msra.mxu0 0.0
    %1493 = vmatprep.subr.mxu0 0.0
    %1494 = vmatpush1.msra.mxu0 0.0
    %1495 = vmatprep.subr.mxu0 0.0
    %1496 = vmatpush1.msra.mxu0 0.0
    %1497 = vmatprep.subr.mxu0 0.0
    %1498 = vmatpush1.msra.mxu0 0.0
    %1499 = vmatprep.subr.mxu0 0.0
    %1500 = vmatpush1.msra.mxu0 0.0
    %1501 = vmatprep.subr.mxu0 0.0
    %1502 = vmatpush1.msra.mxu0 0.0
    %1503 = vmatprep.subr.mxu0 0.0
    %1504 = vmatpush1.msra.mxu0 0.0
    %1505 = vmatprep.subr.mxu0 0.0
    %1506 = vmatpush1.msra.mxu0 0.0
    %1507 = vmatprep.subr.mxu0 0.0
    %1508 = vmatpush1.msra.mxu0 0.0
    %1509 = vmatprep.subr.mxu0 0.0
    %1510 = vmatpush1.msra.mxu0 0.0
    %1511 = vmatprep.subr.mxu0 0.0
    %1512 = vmatpush1.msra.mxu0 0.0
    %1513 = vmatprep.subr.mxu0 0.0
    %1514 = vmatpush1.msra.mxu0 0.0
    %1515 = vmatprep.subr.mxu0 0.0
    %1516 = vmatpush1.msra.mxu0 0.0
    %1517 = vmatprep.subr.mxu0 0.0
    %1518 = vmatpush1.msra.mxu0 0.0
    %1519 = vmatprep.subr.mxu0 0.0
    %1520 = vmatpush1.msra.mxu0 0.0
    %1521 = vmatprep.subr.mxu0 0.0
    %1522 = vmatpush1.msra.mxu0 0.0
    %1523 = vmatprep.subr.mxu0 0.0
    %1524 = vmatpush1.msra.mxu0 0.0
    %1525 = vmatprep.subr.mxu0 0.0
    %1526 = vmatpush1.msra.mxu0 0.0
    %1527 = vmatprep.mubr.f32.mxu0 0.0
    %1528 = vmatmul.mubr.f32.gmra.mrb[0].mxu0 %v1458
    %v1529 = vpop.f32.mrb[0].mxu0
    %v1530 = vadd.f32 %v1455, %v1529
    %v1531 = vpop.f32.mrb[0].mxu0
    %1532 = vmatprep.mubr.f32.mxu0 0.0
    %1533 = vmatmul.mubr.f32.gmra.mrb[0].mxu0 %v1461
    %v1534 = vpop.f32.mrb[0].mxu0
    %v1535 = vadd.f32 %v1455, %v1534
    %v1536 = vpop.f32.mrb[0].mxu0
    %1537 = vdwg.mxu0
    %v1538 = vadd.f32 %v1355, %v1530
    %v1539 = vadd.f32 %v1356, %v1535
    %v1540 = vsel %vm87, %v1538, 0.0
    %1541 = vadd.xlane.f32.xlu0 %v1540
    %v1542 = vpop.xlane.xlu0 %1541
    %v1543 = vsel %vm87, %v1539, 0.0
    %1544 = vadd.xlane.f32.xlu0 %v1543
    %v1545 = vpop.xlane.xlu0 %1544
    %v1546 = vmul.f32 %v1542, %v1324
    %v1547 = vmul.f32 %v1545, %v1324
    %v1548 = vsub.f32 %v1538, %v1546
    %v1549 = vsub.f32 %v1539, %v1547
    %v1550 = vmul.f32 %v1548, %v1548
    %v1551 = vmul.f32 %v1549, %v1549
    %v1552 = vsel %vm87, %v1550, 0.0
    %1553 = vadd.xlane.f32.xlu0 %v1552
    %v1554 = vpop.xlane.xlu0 %1553
    %v1555 = vsel %vm87, %v1551, 0.0
    %1556 = vadd.xlane.f32.xlu0 %v1555
    %v1557 = vpop.xlane.xlu0 %1556
    %v1558 = vmul.f32 %v1554, %v1324
    %v1559 = vmul.f32 %v1557, %v1324
    %v1560 = vadd.f32 %v1558, 1e-05
    %v1561 = vadd.f32 %v1559, 1e-05
    %v1562 = vrsqrt.pop %v1560
    %v1563 = vrsqrt.pop %v1561
    %v1564 = vmul.f32 %v1548, %v1562
    %v1565 = vmul.f32 %v1549, %v1563
    %v1566 = vlaneseq
    %v1567 = vshrl.u32 %v1566, 7
    %v1568 = vsub.s32 0, %v1567
    %v1569 = vrot.slane %v60, %v1568
    %v1570 = vmul.f32 %v1564, %v1569
    %v1571 = vmul.f32 %v1565, %v1569
    %v1572 = vlaneseq
    %v1573 = vshrl.u32 %v1572, 7
    %v1574 = vsub.s32 0, %v1573
    %v1575 = vrot.slane %v61, %v1574
    %v1576 = vadd.f32 %v1570, %v1575
    %v1577 = vadd.f32 %v1571, %v1575
    %1578 = vst.msk [vmem:[#allocation8] sm:$0xff] %vm87, %v1576
    %1579 = vst.msk [vmem:[#allocation8 + $0x8] sm:$0xff] %vm87, %v1577
    // Predicated region
    $region26: #{encoder_bottleneck.1} parent=1 // pred_check
      _
    $region27: #{encoder_bottleneck.1} parent=1 // pred_check_branch
      %1581 = sbr.rel (0) target = $region29
    $region28: #{encoder_bottleneck.1} parent=1 // pred_region
      %s1583 = ssub.s32 256, 256
      %1584 = vsyncadd [#allocation4], %s1583
      %s1585 = sshll.u32 [#allocation8], 4
      %s1586 = int_to_ptr.vmem [resolvable:$true] %s1585
      %1591 = dma.vmem_to_hbm [thread:$0]  %s1586, 256, %s3, [#allocation4], 128, 128, 8
    $region29: #{encoder_bottleneck.1} parent=1 // pred_fallthru
      _
    // Predicated region
    $region30: #{encoder_bottleneck.1} parent=1 // pred_check
      _
    $region31: #{encoder_bottleneck.1} parent=1 // pred_check_branch
      %1593 = sbr.rel (0) target = $region33
    $region32: #{encoder_bottleneck.1} parent=1 // pred_region
      %1594 = dma.done [#allocation4], 256
    $region33: #{encoder_bottleneck.1} parent=1 // pred_fallthru
      _
    %1595 = vsyncpa [#allocation3], 1
    %1596 = vsyncpa [#allocation6], 1
    %1597 = vsyncpa [#allocation4], 1

</llo_original>
